<compile_context>
chip_gen: v6e
topology: v6e:2x2x1
jax: 0.10.0
libtpu: 0.0.40
codegen_flags: <defaults>
</compile_context>

<pallas_src>
import functools

import jax
import jax.numpy as jnp
from jax import lax
from jax.experimental import pallas as pl
from jax.experimental.pallas import tpu as pltpu

# Per-grid-step overhead is ~0.35us; keep each block's input slab well above
# the bytes that DMA in that time (v7x ~3.2 TB/s -> ~1.1 MiB per 0.35us).
_MIN_BLOCK_BYTES = 2 * 1024 * 1024
_TARGET_BLOCK_BYTES = 4 * 1024 * 1024


def _vmem_budget_bytes():
    """Scoped-VMEM budget to request for this kernel (~half of physical VMEM)."""
    cap = 64 * 1024 * 1024  # conservative fallback (v7x physical VMEM per core)
    try:
        cap = int(pltpu.get_tpu_info().vmem_capacity_bytes)
    except Exception:
        pass
    # v5e/v6e (128 MiB physical) -> 64 MiB scoped; v7x (64 MiB) -> 32 MiB scoped.
    return max(min(cap // 2, 64 * 1024 * 1024), 32 * 1024 * 1024)


def _fold_lane_target():
    """Lane width to fold small-hidden rows up to (256 on v6e/v7x, 128 on <=v5)."""
    try:
        kind = jax.devices()[0].device_kind.lower()
    except Exception:
        return 128
    for old in ("v2", "v3", "v4", "v5"):
        if old in kind:
            return 128
    return 256


def _ln_rowwise_kernel(x_ref, gamma_ref, beta_ref, o_ref, *, eps, eps_inside,
                       hidden, mxu_sums):
    h = jnp.float32(hidden)
    ddof = jnp.float32(max(hidden - 1, 1))   # torch .std()/.var() -> unbiased

    if mxu_sums:
        # bf16 input on a lane-aligned slab: row sum / sum-of-squares on the
        # otherwise-idle MXU with f32 accumulation (frees VPU slots) and an
        # elementwise tail mostly in bf16 so the kernel stays HBM-bound.
        x = x_ref[...]                                         # [tr, L] bf16
        ones_col = jnp.ones((x.shape[-1], 1), dtype=x.dtype)   # [L, 1]
        s = jnp.dot(x, ones_col, preferred_element_type=jnp.float32)      # [tr,1]
        sq = jnp.dot(x * x, ones_col, preferred_element_type=jnp.float32)  # [tr,1]
        mean = s / h
        var = jnp.maximum((sq - s * mean) / ddof, 0.0)
        std = jnp.sqrt(var + eps) if eps_inside else jnp.sqrt(var) + eps
        inv = pl.reciprocal(std, approx=True)                  # per-row, cheap
        y = ((x - mean) * inv).astype(o_ref.dtype)             # f32 sub/mul
        gamma = gamma_ref[...].astype(o_ref.dtype)
        beta = beta_ref[...].astype(o_ref.dtype)
        o_ref[...] = y * gamma + beta                          # bf16 VALU tail
    else:
        # f32 (or unaligned) path: XLU row reductions + per-row exact recip.
        x = x_ref[...].astype(jnp.float32)
        gamma = gamma_ref[...].astype(jnp.float32)
        beta = beta_ref[...].astype(jnp.float32)
        s = jnp.sum(x, axis=-1, keepdims=True)
        sq = jnp.sum(x * x, axis=-1, keepdims=True)
        mean = s / h
        var = jnp.maximum((sq - s * mean) / ddof, 0.0)
        std = jnp.sqrt(var + eps) if eps_inside else jnp.sqrt(var) + eps
        inv = pl.reciprocal(std, approx=False)
        o_ref[...] = ((x - mean) * inv * gamma + beta).astype(o_ref.dtype)


def _ln_folded_kernel(x_ref, seg_ref, gamma_ref, beta_ref, o_ref, *, eps,
                      eps_inside, hidden):
    # hidden < 128: `fold` logical rows are packed along the lane axis so loads
    # and stores stay lane-dense (no masked vst).  Per-segment sums use the
    # resident block-diagonal 0/1 matrix (built once in the wrapper) on the
    # otherwise-idle MXU.
    x = x_ref[...].astype(jnp.float32)        # [tr, lanes]
    seg = seg_ref[...]                        # [lanes, lanes] f32, resident
    gamma = gamma_ref[...].astype(jnp.float32)
    beta = beta_ref[...].astype(jnp.float32)
    h = jnp.float32(hidden)
    ddof = jnp.float32(max(hidden - 1, 1))
    dot = functools.partial(jnp.dot, precision=lax.Precision.HIGHEST,
                            preferred_element_type=jnp.float32)
    s_b = dot(x, seg)                         # per-segment sums, broadcast
    sq_b = dot(x * x, seg)
    mean_b = s_b / h
    var_b = jnp.maximum((sq_b - s_b * mean_b) / ddof, 0.0)
    if eps_inside:
        inv_b = lax.rsqrt(var_b + eps)        # fused sqrt+recip: 1 EUP pass
    else:
        inv_b = pl.reciprocal(jnp.sqrt(var_b) + eps, approx=False)
    o_ref[...] = ((x - mean_b) * inv_b * gamma + beta).astype(o_ref.dtype)


def _layernorm_2d(x2, gamma2, beta2, seg2, *, eps, eps_inside, hidden, row_tile):
    rows_f, lanes = x2.shape
    itemsize = jnp.dtype(x2.dtype).itemsize
    # Sublane packing: f32 -> 8 rows/vreg, bf16 -> 16, int8/fp8 -> 32.
    sub = max(8, 32 // max(itemsize, 1))

    budget = _vmem_budget_bytes()
    # Explicit VMEM accounting per block row:
    #  - double-buffered input + output pipeline tiles at the input dtype,
    #  - ~4 live f32 in-kernel temporaries (x cast / x*x / broadcast stats /
    #    output expression) at the largest tile.
    bytes_per_row = lanes * itemsize * 2 * 2 + lanes * 4 * 4
    usable = (budget * 3) // 4
    if seg2 is not None:
        usable -= int(seg2.size) * 4 * 2      # resident segment matrix
    max_tr = max(int(usable // bytes_per_row), sub)

    row_bytes = lanes * itemsize
    target_tr = max(int(_TARGET_BLOCK_BYTES // row_bytes), 1)
    min_tr = max(int(_MIN_BLOCK_BYTES // row_bytes), 1)

    if row_tile is not None:
        # Clamp user tile to the budget-derived maximum (portable across gens).
        tr = max(min(int(row_tile), rows_f, max_tr), 1)
    else:
        tr = min(max_tr, rows_f, target_tr)
        # Prefer >= 8 grid steps (>= 4 per v7x TensorCore) so each core keeps
        # double-buffering, as long as blocks stay above the overhead floor.
        tr8 = -(-rows_f // 8)
        tr8 = ((tr8 + sub - 1) // sub) * sub
        if tr8 >= min_tr:
            tr = min(tr, tr8)
    if rows_f <= sub:
        tr = rows_f                           # block == full dim (allowed)
    else:
        tr = max(sub, (tr // sub) * sub)      # multiple of sublane packing

    grid = (pl.cdiv(rows_f, tr),)

    if seg2 is None:
        mxu_sums = (x2.dtype == jnp.bfloat16) and (lanes % 128 == 0)
        kernel = functools.partial(_ln_rowwise_kernel, eps=eps,
                                   eps_inside=eps_inside, hidden=hidden,
                                   mxu_sums=mxu_sums)
        in_specs = [
            pl.BlockSpec((tr, lanes), lambda i: (i, 0)),
            pl.BlockSpec((1, lanes), lambda i: (0, 0)),      # gamma, resident
            pl.BlockSpec((1, lanes), lambda i: (0, 0)),      # beta, resident
        ]
        operands = (x2, gamma2, beta2)
    else:
        kernel = functools.partial(_ln_folded_kernel, eps=eps,
                                   eps_inside=eps_inside, hidden=hidden)
        in_specs = [
            pl.BlockSpec((tr, lanes), lambda i: (i, 0)),
            pl.BlockSpec((lanes, lanes), lambda i: (0, 0)),  # seg, resident
            pl.BlockSpec((1, lanes), lambda i: (0, 0)),      # gamma, resident
            pl.BlockSpec((1, lanes), lambda i: (0, 0)),      # beta, resident
        ]
        operands = (x2, seg2, gamma2, beta2)

    return pl.pallas_call(
        kernel,
        out_shape=jax.ShapeDtypeStruct((rows_f, lanes), x2.dtype),
        grid_spec=pltpu.PrefetchScalarGridSpec(
            num_scalar_prefetch=0,
            grid=grid,
            in_specs=in_specs,
            out_specs=pl.BlockSpec((tr, lanes), lambda i: (i, 0)),
        ),
        compiler_params=pltpu.CompilerParams(
            dimension_semantics=("parallel",),
            vmem_limit_bytes=int(budget),
        ),
    )(*operands)


def layer_norm(x, gamma, beta, *, eps=1e-6, eps_inside=False, row_tile=None):
    """LayerNorm over the last axis, matching the PyTorch module:
    mean/std over dim=-1 with the UNBIASED std (ddof=1); eps added outside the
    sqrt unless eps_inside=True; out = gamma * (x - mean) / std + beta.
    """
    orig_shape = x.shape
    hidden = int(orig_shape[-1])
    rows = 1
    for d in orig_shape[:-1]:
        rows *= int(d)

    # Lane-dense fold: when hidden < 128, pack `fold` consecutive rows along
    # the lane axis so the slab presented to the kernel is 128 (<=v5) or 256
    # (v6e/v7x) lanes wide -> long unmasked stores, fewer per-row scalars.
    fold = 1
    if hidden < 128:
        for lt in (_fold_lane_target(), 128):
            k = lt // hidden if (hidden > 0 and lt % hidden == 0) else 0
            if k > 1 and rows % k == 0:
                fold = k
                break

    gamma2 = gamma.reshape(1, hidden).astype(jnp.float32)
    beta2 = beta.reshape(1, hidden).astype(jnp.float32)

    def run(k):
        lanes = k * hidden
        x2 = x.reshape(rows // k, lanes)
        g2 = jnp.tile(gamma2, (1, k))
        b2 = jnp.tile(beta2, (1, k))
        if k > 1:
            # Block-diagonal 0/1 segment matrix, built once (grid-invariant).
            seg_ids = jnp.arange(lanes, dtype=jnp.int32) // hidden
            seg2 = (seg_ids[:, None] == seg_ids[None, :]).astype(jnp.float32)
        else:
            seg2 = None
        return _layernorm_2d(x2, g2, b2, seg2, eps=eps, eps_inside=eps_inside,
                             hidden=hidden, row_tile=row_tile)

    if fold > 1:
        try:
            out2 = run(fold)
        except Exception:
            # Fall back to the straightforward layout if the folded (MXU
            # segment-sum) lowering is unavailable on this toolchain.
            out2 = run(1)
    else:
        out2 = run(1)

    return out2.reshape(orig_shape)


if __name__ == "__main__":
    key = jax.random.PRNGKey(0)

    def reference(x, gamma, beta, eps=1e-6, eps_inside=False):
        x = x.astype(jnp.float32)
        mean = jnp.mean(x, axis=-1, keepdims=True)
        var = jnp.var(x, axis=-1, keepdims=True, ddof=1)
        std = jnp.sqrt(var + eps) if eps_inside else jnp.sqrt(var) + eps
        return gamma * (x - mean) / std + beta

    k1, k2, k3 = jax.random.split(key, 3)

    # Case 1: module-consistent small shape (hidden < 128 exercises the
    # lane-dense folded MXU segment-sum path). Non-trivial gamma/beta.
    batch, seq, hidden = 2, 8, 32
    gamma = 1.0 + 0.1 * jnp.arange(hidden, dtype=jnp.float32) / hidden
    beta = 0.05 * jnp.arange(hidden, dtype=jnp.float32) / hidden - 0.02
    x = jax.random.normal(k1, (batch, seq, hidden), dtype=jnp.float32)
    out = jax.block_until_ready(layer_norm(x, gamma, beta, eps=1e-6,
                                           eps_inside=False))
    ref = reference(x, gamma, beta)
    assert out.shape == x.shape
    assert jnp.allclose(out, ref, atol=2e-5, rtol=2e-5), \
        "mismatch vs reference (hidden=32)"

    # Case 2: lane-aligned hidden, f32: plain row-tiled path (XLU row sums).
    hidden_b = 256
    gamma_b = 1.0 + 0.1 * jnp.arange(hidden_b, dtype=jnp.float32) / hidden_b
    beta_b = 0.05 * jnp.arange(hidden_b, dtype=jnp.float32) / hidden_b - 0.02
    x_b = jax.random.normal(k2, (batch, seq, hidden_b), dtype=jnp.float32)
    out_b = jax.block_until_ready(layer_norm(x_b, gamma_b, beta_b, eps=1e-6,
                                             eps_inside=False))
    ref_b = reference(x_b, gamma_b, beta_b)
    assert jnp.allclose(out_b, ref_b, atol=2e-5, rtol=2e-5), \
        "mismatch vs reference (hidden=256)"

    # Case 3: bf16 input exercises the MXU row-sum + bf16-tail path.
    hidden_c = 128
    gamma_c = 1.0 + 0.1 * jnp.arange(hidden_c, dtype=jnp.float32) / hidden_c
    beta_c = 0.05 * jnp.arange(hidden_c, dtype=jnp.float32) / hidden_c - 0.02
    x_c = jax.random.normal(k3, (2, 32, hidden_c),
                            dtype=jnp.float32).astype(jnp.bfloat16)
    out_c = jax.block_until_ready(layer_norm(x_c, gamma_c, beta_c, eps=1e-6,
                                             eps_inside=False))
    ref_c = reference(x_c, gamma_c, beta_c)
    assert jnp.allclose(out_c.astype(jnp.float32), ref_c, atol=6e-2, rtol=6e-2), \
        "mismatch vs reference (bf16, hidden=128)"

    print("KERNEL_OK")
</pallas_src>

<mosaic_0001>
module attributes {stable_mosaic.version = 11 : i64} {
  func.func @_ln_folded_kernel(%arg0: i32, %arg1: memref<2x256xf32, #tpu.memory_space<vmem>>, %arg2: memref<256x256xf32, #tpu.memory_space<vmem>>, %arg3: memref<1x256xf32, #tpu.memory_space<vmem>>, %arg4: memref<1x256xf32, #tpu.memory_space<vmem>>, %arg5: memref<2x256xf32, #tpu.memory_space<vmem>>) attributes {dimension_semantics = [#tpu.dimension_semantics<parallel>], iteration_bounds = array<i64: 1>, scalar_prefetch = 0 : i64, scratch_operands = 0 : i64, tpu.core_type = #tpu.core_type<tc>, window_params = [{transform_indices = @transform_0, window_bounds = array<i64: 2, 256>}, {pipeline_mode = #tpu.pipeline_mode<synchronous>, transform_indices = @transform_1, window_bounds = array<i64: 256, 256>}, {pipeline_mode = #tpu.pipeline_mode<synchronous>, transform_indices = @transform_2, window_bounds = array<i64: 1, 256>}, {pipeline_mode = #tpu.pipeline_mode<synchronous>, transform_indices = @transform_3, window_bounds = array<i64: 1, 256>}, {transform_indices = @transform_4, window_bounds = array<i64: 2, 256>}]} {
    %c0 = arith.constant 0 : index
    %c0_0 = arith.constant 0 : index
    %0 = vector.load %arg1[%c0, %c0_0] : memref<2x256xf32, #tpu.memory_space<vmem>>, vector<2x256xf32>
    %c0_1 = arith.constant 0 : index
    %c0_2 = arith.constant 0 : index
    %1 = vector.load %arg2[%c0_1, %c0_2] : memref<256x256xf32, #tpu.memory_space<vmem>>, vector<256x256xf32>
    %c0_3 = arith.constant 0 : index
    %c0_4 = arith.constant 0 : index
    %2 = vector.load %arg3[%c0_3, %c0_4] : memref<1x256xf32, #tpu.memory_space<vmem>>, vector<1x256xf32>
    %c0_5 = arith.constant 0 : index
    %c0_6 = arith.constant 0 : index
    %3 = vector.load %arg4[%c0_5, %c0_6] : memref<1x256xf32, #tpu.memory_space<vmem>>, vector<1x256xf32>
    %cst = arith.constant dense<0.000000e+00> : vector<2x256xf32>
    %4 = tpu.matmul %0, %1, %cst {dimension_numbers = #tpu.dot_dimension_numbers<[1], [0], [0], [1], [0, 0, 1, 1], [], []>, precision = #tpu.contract_precision<fp32>} : vector<2x256xf32>, vector<256x256xf32>, vector<2x256xf32> -> vector<2x256xf32>
    %5 = arith.mulf %0, %0 : vector<2x256xf32>
    %cst_7 = arith.constant dense<0.000000e+00> : vector<2x256xf32>
    %6 = tpu.matmul %5, %1, %cst_7 {dimension_numbers = #tpu.dot_dimension_numbers<[1], [0], [0], [1], [0, 0, 1, 1], [], []>, precision = #tpu.contract_precision<fp32>} : vector<2x256xf32>, vector<256x256xf32>, vector<2x256xf32> -> vector<2x256xf32>
    %cst_8 = arith.constant 3.200000e+01 : f32
    %7 = vector.broadcast %cst_8 : f32 to vector<2x256xf32>
    %8 = arith.divf %4, %7 : vector<2x256xf32>
    %9 = arith.mulf %4, %8 : vector<2x256xf32>
    %10 = arith.subf %6, %9 : vector<2x256xf32>
    %cst_9 = arith.constant 3.100000e+01 : f32
    %11 = vector.broadcast %cst_9 : f32 to vector<2x256xf32>
    %12 = arith.divf %10, %11 : vector<2x256xf32>
    %cst_10 = arith.constant 0.000000e+00 : f32
    %13 = vector.broadcast %cst_10 : f32 to vector<2x256xf32>
    %14 = arith.maximumf %12, %13 : vector<2x256xf32>
    %15 = math.sqrt %14 : vector<2x256xf32>
    %cst_11 = arith.constant 9.99999997E-7 : f32
    %16 = vector.broadcast %cst_11 : f32 to vector<2x256xf32>
    %17 = arith.addf %15, %16 : vector<2x256xf32>
    %18 = tpu.reciprocal %17 : vector<2x256xf32> -> vector<2x256xf32>
    %19 = arith.subf %0, %8 : vector<2x256xf32>
    %20 = arith.mulf %19, %18 : vector<2x256xf32>
    %21 = vector.broadcast %2 : vector<1x256xf32> to vector<2x256xf32>
    %22 = arith.mulf %20, %21 : vector<2x256xf32>
    %23 = vector.broadcast %3 : vector<1x256xf32> to vector<2x256xf32>
    %24 = arith.addf %22, %23 : vector<2x256xf32>
    %c0_12 = arith.constant 0 : index
    %c0_13 = arith.constant 0 : index
    %25 = vector.load %arg5[%c0_12, %c0_13] : memref<2x256xf32, #tpu.memory_space<vmem>>, vector<2x256xf32>
    tpu.vector_store %arg5[%c0_12, %c0_13], %24 {strides = array<i32>} : memref<2x256xf32, #tpu.memory_space<vmem>>, vector<2x256xf32>,
    return
  }
  func.func @transform_0(%arg0: i32) -> (i32, i32) {
    %c0_i32 = arith.constant 0 : i32
    %c0_i32_0 = arith.constant 0 : i32
    return %arg0, %c0_i32 : i32, i32
  }
  func.func @transform_1(%arg0: i32) -> (i32, i32) {
    %c0_i32 = arith.constant 0 : i32
    %c0_i32_0 = arith.constant 0 : i32
    %c0_i32_1 = arith.constant 0 : i32
    return %c0_i32, %c0_i32_0 : i32, i32
  }
  func.func @transform_2(%arg0: i32) -> (i32, i32) {
    %c0_i32 = arith.constant 0 : i32
    %c0_i32_0 = arith.constant 0 : i32
    %c0_i32_1 = arith.constant 0 : i32
    return %c0_i32, %c0_i32_0 : i32, i32
  }
  func.func @transform_3(%arg0: i32) -> (i32, i32) {
    %c0_i32 = arith.constant 0 : i32
    %c0_i32_0 = arith.constant 0 : i32
    %c0_i32_1 = arith.constant 0 : i32
    return %c0_i32, %c0_i32_0 : i32, i32
  }
  func.func @transform_4(%arg0: i32) -> (i32, i32) {
    %c0_i32 = arith.constant 0 : i32
    %c0_i32_0 = arith.constant 0 : i32
    return %arg0, %c0_i32 : i32, i32
  }
}

module attributes {stable_mosaic.version = 11 : i64} {
  func.func @_ln_rowwise_kernel(%arg0: i32, %arg1: memref<16x32xf32, #tpu.memory_space<vmem>>, %arg2: memref<1x32xf32, #tpu.memory_space<vmem>>, %arg3: memref<1x32xf32, #tpu.memory_space<vmem>>, %arg4: memref<16x32xf32, #tpu.memory_space<vmem>>) attributes {dimension_semantics = [#tpu.dimension_semantics<parallel>], iteration_bounds = array<i64: 1>, scalar_prefetch = 0 : i64, scratch_operands = 0 : i64, tpu.core_type = #tpu.core_type<tc>, window_params = [{transform_indices = @transform_0, window_bounds = array<i64: 16, 32>}, {pipeline_mode = #tpu.pipeline_mode<synchronous>, transform_indices = @transform_1, window_bounds = array<i64: 1, 32>}, {pipeline_mode = #tpu.pipeline_mode<synchronous>, transform_indices = @transform_2, window_bounds = array<i64: 1, 32>}, {transform_indices = @transform_3, window_bounds = array<i64: 16, 32>}]} {
    %c0 = arith.constant 0 : index
    %c0_0 = arith.constant 0 : index
    %0 = vector.load %arg1[%c0, %c0_0] : memref<16x32xf32, #tpu.memory_space<vmem>>, vector<16x32xf32>
    %c0_1 = arith.constant 0 : index
    %c0_2 = arith.constant 0 : index
    %1 = vector.load %arg2[%c0_1, %c0_2] : memref<1x32xf32, #tpu.memory_space<vmem>>, vector<1x32xf32>
    %c0_3 = arith.constant 0 : index
    %c0_4 = arith.constant 0 : index
    %2 = vector.load %arg3[%c0_3, %c0_4] : memref<1x32xf32, #tpu.memory_space<vmem>>, vector<1x32xf32>
    %cst = arith.constant dense<0.000000e+00> : vector<16xf32>
    %3 = vector.multi_reduction <add>, %0, %cst [1] : vector<16x32xf32> to vector<16xf32>
    %4 = vector.shape_cast %3 : vector<16xf32> to vector<16x1xf32>
    %5 = arith.mulf %0, %0 : vector<16x32xf32>
    %cst_5 = arith.constant dense<0.000000e+00> : vector<16xf32>
    %6 = vector.multi_reduction <add>, %5, %cst_5 [1] : vector<16x32xf32> to vector<16xf32>
    %7 = vector.shape_cast %6 : vector<16xf32> to vector<16x1xf32>
    %cst_6 = arith.constant 3.200000e+01 : f32
    %8 = vector.broadcast %cst_6 : f32 to vector<16x1xf32>
    %9 = arith.divf %4, %8 : vector<16x1xf32>
    %10 = arith.mulf %4, %9 : vector<16x1xf32>
    %11 = arith.subf %7, %10 : vector<16x1xf32>
    %cst_7 = arith.constant 3.100000e+01 : f32
    %12 = vector.broadcast %cst_7 : f32 to vector<16x1xf32>
    %13 = arith.divf %11, %12 : vector<16x1xf32>
    %cst_8 = arith.constant 0.000000e+00 : f32
    %14 = vector.broadcast %cst_8 : f32 to vector<16x1xf32>
    %15 = arith.maximumf %13, %14 : vector<16x1xf32>
    %16 = math.sqrt %15 : vector<16x1xf32>
    %cst_9 = arith.constant 9.99999997E-7 : f32
    %17 = vector.broadcast %cst_9 : f32 to vector<16x1xf32>
    %18 = arith.addf %16, %17 : vector<16x1xf32>
    %19 = tpu.reciprocal %18 : vector<16x1xf32> -> vector<16x1xf32>
    %20 = vector.broadcast %9 : vector<16x1xf32> to vector<16x32xf32>
    %21 = arith.subf %0, %20 : vector<16x32xf32>
    %22 = vector.broadcast %19 : vector<16x1xf32> to vector<16x32xf32>
    %23 = arith.mulf %21, %22 : vector<16x32xf32>
    %24 = vector.broadcast %1 : vector<1x32xf32> to vector<16x32xf32>
    %25 = arith.mulf %23, %24 : vector<16x32xf32>
    %26 = vector.broadcast %2 : vector<1x32xf32> to vector<16x32xf32>
    %27 = arith.addf %25, %26 : vector<16x32xf32>
    %c0_10 = arith.constant 0 : index
    %c0_11 = arith.constant 0 : index
    %28 = vector.load %arg4[%c0_10, %c0_11] : memref<16x32xf32, #tpu.memory_space<vmem>>, vector<16x32xf32>
    tpu.vector_store %arg4[%c0_10, %c0_11], %27 {strides = array<i32>} : memref<16x32xf32, #tpu.memory_space<vmem>>, vector<16x32xf32>,
    return
  }
  func.func @transform_0(%arg0: i32) -> (i32, i32) {
    %c0_i32 = arith.constant 0 : i32
    %c0_i32_0 = arith.constant 0 : i32
    return %arg0, %c0_i32 : i32, i32
  }
  func.func @transform_1(%arg0: i32) -> (i32, i32) {
    %c0_i32 = arith.constant 0 : i32
    %c0_i32_0 = arith.constant 0 : i32
    %c0_i32_1 = arith.constant 0 : i32
    return %c0_i32, %c0_i32_0 : i32, i32
  }
  func.func @transform_2(%arg0: i32) -> (i32, i32) {
    %c0_i32 = arith.constant 0 : i32
    %c0_i32_0 = arith.constant 0 : i32
    %c0_i32_1 = arith.constant 0 : i32
    return %c0_i32, %c0_i32_0 : i32, i32
  }
  func.func @transform_3(%arg0: i32) -> (i32, i32) {
    %c0_i32 = arith.constant 0 : i32
    %c0_i32_0 = arith.constant 0 : i32
    return %arg0, %c0_i32 : i32, i32
  }
}

</mosaic_0001>

<llo_original>
// kernel: tpu_custom_call.1
$region0: #{tpu_custom_call.1}
  #allocation0 [shape = 'u32[]', space=smem, size = 0x4, offset = 0x4, fixed_abs, tag = 'smem constant byte address 0x4 - core index']
  #allocation1 [shape = 'u32[144,128]{1,0:T(1,128)}', space=vmem, size = 0x12000, scoped, tag = 'internal scratch']
  %s0 = inlined_call_operand.hbm [shape: f32[2,256], index: 0, kind: input, shape index: {}]
  %s1 = inlined_call_operand.hbm [shape: f32[256,256], index: 1, kind: input, shape index: {}]
  %s2 = inlined_call_operand.vmem [shape: f32[1,256], index: 2, kind: input, shape index: {}]
  %s3 = inlined_call_operand.vmem [shape: f32[1,256], index: 3, kind: input, shape index: {}]
  %s4 = inlined_call_operand.hbm [shape: f32[2,256], index: 4, kind: output, shape index: {}]
  %s5 = sld [smem:[#allocation0]]
  $region34: #{tpu_custom_call.1} parent=0
    _
  %s7 = ssub.s32 1, %s5
  %s8 = scalar_select 0, %s7, %s5
  $region1: #{tpu_custom_call.1} parent=0
    #allocation2 [shape = 'u8[2048]{0}', space=vmem, size = 0x800, scoped, tag = 'input window, operand 0, single buffered']
    #allocation3 [shape = 's32[1]{0}', space=sflag, size = 0x4, scoped, tag = 'scoped memory for tpu_custom_call.1']
    #allocation4 [shape = 's32[1]{0}', space=sflag, size = 0x4, scoped, tag = 'scoped memory for tpu_custom_call.1']
    #allocation5 [shape = 'u8[262144]{0}', space=vmem, size = 0x40000, scoped, tag = 'input window, operand 1, single buffered']
    #allocation6 [shape = 's32[1]{0}', space=sflag, size = 0x4, scoped, tag = 'scoped memory for tpu_custom_call.1']
    #allocation7 [shape = 'u8[2048]{0}', space=vmem, size = 0x800, scoped, tag = 'output window, operand 0, single buffered']
    %9 = vsyncpa [#allocation3], 0
    %10 = vsyncpa [#allocation6], 0
    %11 = vsyncpa [#allocation4], 0
    // Predicated region
    $region2: #{tpu_custom_call.1} parent=1 // pred_check
      _
    $region3: #{tpu_custom_call.1} parent=1 // pred_check_branch
      %13 = sbr.rel (0) target = $region5
    $region4: #{tpu_custom_call.1} parent=1 // pred_region
      %s15 = ssub.s32 64, 64
      %16 = vsyncadd [#allocation3], %s15
      %s18 = sshll.u32 [#allocation2], 4
      %s19 = int_to_ptr.vmem [resolvable:$true] %s18
      %21 = dma.hbm_to_vmem [thread:$0]  %s0, 64, %s19, [#allocation3]
    $region5: #{tpu_custom_call.1} parent=1 // pred_fallthru
      _
    // Predicated region
    $region6: #{tpu_custom_call.1} parent=1 // pred_check
      _
    $region7: #{tpu_custom_call.1} parent=1 // pred_check_branch
      %23 = sbr.rel (0) target = $region9
    $region8: #{tpu_custom_call.1} parent=1 // pred_region
      %s25 = ssub.s32 8192, 8192
      %26 = vsyncadd [#allocation6], %s25
      %s27 = sshll.u32 [#allocation5], 4
      %s28 = int_to_ptr.vmem [resolvable:$true] %s27
      %33 = dma.hbm_to_vmem [thread:$0]  %s1, 8192, %s28, [#allocation6], 256, 256, 16
    $region9: #{tpu_custom_call.1} parent=1 // pred_fallthru
      _
    // Predicated region
    $region10: #{tpu_custom_call.1} parent=1 // pred_check
      _
    $region11: #{tpu_custom_call.1} parent=1 // pred_check_branch
      %35 = sbr.rel (0) target = $region13
    $region12: #{tpu_custom_call.1} parent=1 // pred_region
      _
    $region13: #{tpu_custom_call.1} parent=1 // pred_fallthru
      _
    // Predicated region
    $region14: #{tpu_custom_call.1} parent=1 // pred_check
      _
    $region15: #{tpu_custom_call.1} parent=1 // pred_check_branch
      %37 = sbr.rel (0) target = $region17
    $region16: #{tpu_custom_call.1} parent=1 // pred_region
      _
    $region17: #{tpu_custom_call.1} parent=1 // pred_fallthru
      _
    // Predicated region
    $region18: #{tpu_custom_call.1} parent=1 // pred_check
      _
    $region19: #{tpu_custom_call.1} parent=1 // pred_check_branch
      %39 = sbr.rel (0) target = $region21
    $region20: #{tpu_custom_call.1} parent=1 // pred_region
      %40 = dma.done [#allocation3], 64
    $region21: #{tpu_custom_call.1} parent=1 // pred_fallthru
      _
    // Predicated region
    $region22: #{tpu_custom_call.1} parent=1 // pred_check
      _
    $region23: #{tpu_custom_call.1} parent=1 // pred_check_branch
      %42 = sbr.rel (0) target = $region25
    $region24: #{tpu_custom_call.1} parent=1 // pred_region
      %43 = dma.done [#allocation6], 8192
    $region25: #{tpu_custom_call.1} parent=1 // pred_fallthru
      _
    %v44 = vld [vmem:[#allocation2] sm:$0xf]
    %v45 = vld [vmem:[#allocation5] sm:$0xff]
    %v46 = vld [vmem:[#allocation5 + $0x8] sm:$0xff]
    %v47 = vld [vmem:[#allocation5 + $0x10] sm:$0xff]
    %v48 = vld [vmem:[#allocation5 + $0x18] sm:$0xff]
    %v49 = vld [vmem:[#allocation5 + $0x20] sm:$0xff]
    %v50 = vld [vmem:[#allocation5 + $0x28] sm:$0xff]
    %v51 = vld [vmem:[#allocation5 + $0x30] sm:$0xff]
    %v52 = vld [vmem:[#allocation5 + $0x38] sm:$0xff]
    %v53 = vld [vmem:[#allocation5 + $0x40] sm:$0xff]
    %v54 = vld [vmem:[#allocation5 + $0x48] sm:$0xff]
    %v55 = vld [vmem:[#allocation5 + $0x50] sm:$0xff]
    %v56 = vld [vmem:[#allocation5 + $0x58] sm:$0xff]
    %v57 = vld [vmem:[#allocation5 + $0x60] sm:$0xff]
    %v58 = vld [vmem:[#allocation5 + $0x68] sm:$0xff]
    %v59 = vld [vmem:[#allocation5 + $0x70] sm:$0xff]
    %v60 = vld [vmem:[#allocation5 + $0x78] sm:$0xff]
    %v61 = vld [vmem:[#allocation5 + $0x80] sm:$0xff]
    %v62 = vld [vmem:[#allocation5 + $0x88] sm:$0xff]
    %v63 = vld [vmem:[#allocation5 + $0x90] sm:$0xff]
    %v64 = vld [vmem:[#allocation5 + $0x98] sm:$0xff]
    %v65 = vld [vmem:[#allocation5 + $0xa0] sm:$0xff]
    %v66 = vld [vmem:[#allocation5 + $0xa8] sm:$0xff]
    %v67 = vld [vmem:[#allocation5 + $0xb0] sm:$0xff]
    %v68 = vld [vmem:[#allocation5 + $0xb8] sm:$0xff]
    %v69 = vld [vmem:[#allocation5 + $0xc0] sm:$0xff]
    %v70 = vld [vmem:[#allocation5 + $0xc8] sm:$0xff]
    %v71 = vld [vmem:[#allocation5 + $0xd0] sm:$0xff]
    %v72 = vld [vmem:[#allocation5 + $0xd8] sm:$0xff]
    %v73 = vld [vmem:[#allocation5 + $0xe0] sm:$0xff]
    %v74 = vld [vmem:[#allocation5 + $0xe8] sm:$0xff]
    %v75 = vld [vmem:[#allocation5 + $0xf0] sm:$0xff]
    %v76 = vld [vmem:[#allocation5 + $0xf8] sm:$0xff]
    %v77 = vld [vmem:[#allocation5 + $0x100] sm:$0xff]
    %v78 = vld [vmem:[#allocation5 + $0x108] sm:$0xff]
    %v79 = vld [vmem:[#allocation5 + $0x110] sm:$0xff]
    %v80 = vld [vmem:[#allocation5 + $0x118] sm:$0xff]
    %v81 = vld [vmem:[#allocation5 + $0x120] sm:$0xff]
    %v82 = vld [vmem:[#allocation5 + $0x128] sm:$0xff]
    %v83 = vld [vmem:[#allocation5 + $0x130] sm:$0xff]
    %v84 = vld [vmem:[#allocation5 + $0x138] sm:$0xff]
    %v85 = vld [vmem:[#allocation5 + $0x140] sm:$0xff]
    %v86 = vld [vmem:[#allocation5 + $0x148] sm:$0xff]
    %v87 = vld [vmem:[#allocation5 + $0x150] sm:$0xff]
    %v88 = vld [vmem:[#allocation5 + $0x158] sm:$0xff]
    %v89 = vld [vmem:[#allocation5 + $0x160] sm:$0xff]
    %v90 = vld [vmem:[#allocation5 + $0x168] sm:$0xff]
    %v91 = vld [vmem:[#allocation5 + $0x170] sm:$0xff]
    %v92 = vld [vmem:[#allocation5 + $0x178] sm:$0xff]
    %v93 = vld [vmem:[#allocation5 + $0x180] sm:$0xff]
    %v94 = vld [vmem:[#allocation5 + $0x188] sm:$0xff]
    %v95 = vld [vmem:[#allocation5 + $0x190] sm:$0xff]
    %v96 = vld [vmem:[#allocation5 + $0x198] sm:$0xff]
    %v97 = vld [vmem:[#allocation5 + $0x1a0] sm:$0xff]
    %v98 = vld [vmem:[#allocation5 + $0x1a8] sm:$0xff]
    %v99 = vld [vmem:[#allocation5 + $0x1b0] sm:$0xff]
    %v100 = vld [vmem:[#allocation5 + $0x1b8] sm:$0xff]
    %v101 = vld [vmem:[#allocation5 + $0x1c0] sm:$0xff]
    %v102 = vld [vmem:[#allocation5 + $0x1c8] sm:$0xff]
    %v103 = vld [vmem:[#allocation5 + $0x1d0] sm:$0xff]
    %v104 = vld [vmem:[#allocation5 + $0x1d8] sm:$0xff]
    %v105 = vld [vmem:[#allocation5 + $0x1e0] sm:$0xff]
    %v106 = vld [vmem:[#allocation5 + $0x1e8] sm:$0xff]
    %v107 = vld [vmem:[#allocation5 + $0x1f0] sm:$0xff]
    %v108 = vld [vmem:[#allocation5 + $0x1f8] sm:$0xff]
    %v109 = vld [vmem:[%s2] sm:$0x3]
    %v110 = vld [vmem:[%s3] sm:$0x3]
    %v113 = vunpack.c.l.s4 1983009808
    %v114 = vunpack.c.0.s8 %v113
    %v115 = vlaneseq
    %v116 = vshrl.u32 %v115, 7
    %v117 = vsub.s32 %v114, %v116
    %v118 = vrot.slane %v44, %v117
    %v119 = vcombine.high %v118, %v118
    %v122 = vand.u32 %v76, 4294901760
    %123 = vmatprep.subr.mxu0 %v122
    %v124 = vand.u32 %v75, 4294901760
    %125 = vmatpush1.msra.mxu0 %v124
    %v126 = vand.u32 %v74, 4294901760
    %127 = vmatprep.subr.mxu0 %v126
    %v128 = vand.u32 %v73, 4294901760
    %129 = vmatpush1.msra.mxu0 %v128
    %v130 = vand.u32 %v72, 4294901760
    %131 = vmatprep.subr.mxu0 %v130
    %v132 = vand.u32 %v71, 4294901760
    %133 = vmatpush1.msra.mxu0 %v132
    %v134 = vand.u32 %v70, 4294901760
    %135 = vmatprep.subr.mxu0 %v134
    %v136 = vand.u32 %v69, 4294901760
    %137 = vmatpush1.msra.mxu0 %v136
    %v138 = vand.u32 %v68, 4294901760
    %139 = vmatprep.subr.mxu0 %v138
    %v140 = vand.u32 %v67, 4294901760
    %141 = vmatpush1.msra.mxu0 %v140
    %v142 = vand.u32 %v66, 4294901760
    %143 = vmatprep.subr.mxu0 %v142
    %v144 = vand.u32 %v65, 4294901760
    %145 = vmatpush1.msra.mxu0 %v144
    %v146 = vand.u32 %v64, 4294901760
    %147 = vmatprep.subr.mxu0 %v146
    %v148 = vand.u32 %v63, 4294901760
    %149 = vmatpush1.msra.mxu0 %v148
    %v150 = vand.u32 %v62, 4294901760
    %151 = vmatprep.subr.mxu0 %v150
    %v152 = vand.u32 %v61, 4294901760
    %153 = vmatpush1.msra.mxu0 %v152
    %v154 = vand.u32 %v60, 4294901760
    %155 = vmatprep.subr.mxu0 %v154
    %v156 = vand.u32 %v59, 4294901760
    %157 = vmatpush1.msra.mxu0 %v156
    %v158 = vand.u32 %v58, 4294901760
    %159 = vmatprep.subr.mxu0 %v158
    %v160 = vand.u32 %v57, 4294901760
    %161 = vmatpush1.msra.mxu0 %v160
    %v162 = vand.u32 %v56, 4294901760
    %163 = vmatprep.subr.mxu0 %v162
    %v164 = vand.u32 %v55, 4294901760
    %165 = vmatpush1.msra.mxu0 %v164
    %v166 = vand.u32 %v54, 4294901760
    %167 = vmatprep.subr.mxu0 %v166
    %v168 = vand.u32 %v53, 4294901760
    %169 = vmatpush1.msra.mxu0 %v168
    %v170 = vand.u32 %v52, 4294901760
    %171 = vmatprep.subr.mxu0 %v170
    %v172 = vand.u32 %v51, 4294901760
    %173 = vmatpush1.msra.mxu0 %v172
    %v174 = vand.u32 %v50, 4294901760
    %175 = vmatprep.subr.mxu0 %v174
    %v176 = vand.u32 %v49, 4294901760
    %177 = vmatpush1.msra.mxu0 %v176
    %v178 = vand.u32 %v48, 4294901760
    %179 = vmatprep.subr.mxu0 %v178
    %v180 = vand.u32 %v47, 4294901760
    %181 = vmatpush1.msra.mxu0 %v180
    %v182 = vand.u32 %v46, 4294901760
    %183 = vmatprep.subr.mxu0 %v182
    %v184 = vand.u32 %v45, 4294901760
    %185 = vmatpush1.msra.mxu0 %v184
    %v186 = vand.u32 %v108, 4294901760
    %187 = vmatprep.subr.mxu0 %v186
    %v188 = vand.u32 %v107, 4294901760
    %189 = vmatpush2.msra.mxu0 %v188
    %v190 = vand.u32 %v106, 4294901760
    %191 = vmatprep.subr.mxu0 %v190
    %v192 = vand.u32 %v105, 4294901760
    %193 = vmatpush2.msra.mxu0 %v192
    %v194 = vand.u32 %v104, 4294901760
    %195 = vmatprep.subr.mxu0 %v194
    %v196 = vand.u32 %v103, 4294901760
    %197 = vmatpush2.msra.mxu0 %v196
    %v198 = vand.u32 %v102, 4294901760
    %199 = vmatprep.subr.mxu0 %v198
    %v200 = vand.u32 %v101, 4294901760
    %201 = vmatpush2.msra.mxu0 %v200
    %v202 = vand.u32 %v100, 4294901760
    %203 = vmatprep.subr.mxu0 %v202
    %v204 = vand.u32 %v99, 4294901760
    %205 = vmatpush2.msra.mxu0 %v204
    %v206 = vand.u32 %v98, 4294901760
    %207 = vmatprep.subr.mxu0 %v206
    %v208 = vand.u32 %v97, 4294901760
    %209 = vmatpush2.msra.mxu0 %v208
    %v210 = vand.u32 %v96, 4294901760
    %211 = vmatprep.subr.mxu0 %v210
    %v212 = vand.u32 %v95, 4294901760
    %213 = vmatpush2.msra.mxu0 %v212
    %v214 = vand.u32 %v94, 4294901760
    %215 = vmatprep.subr.mxu0 %v214
    %v216 = vand.u32 %v93, 4294901760
    %217 = vmatpush2.msra.mxu0 %v216
    %v218 = vand.u32 %v92, 4294901760
    %219 = vmatprep.subr.mxu0 %v218
    %v220 = vand.u32 %v91, 4294901760
    %221 = vmatpush2.msra.mxu0 %v220
    %v222 = vand.u32 %v90, 4294901760
    %223 = vmatprep.subr.mxu0 %v222
    %v224 = vand.u32 %v89, 4294901760
    %225 = vmatpush2.msra.mxu0 %v224
    %v226 = vand.u32 %v88, 4294901760
    %227 = vmatprep.subr.mxu0 %v226
    %v228 = vand.u32 %v87, 4294901760
    %229 = vmatpush2.msra.mxu0 %v228
    %v230 = vand.u32 %v86, 4294901760
    %231 = vmatprep.subr.mxu0 %v230
    %v232 = vand.u32 %v85, 4294901760
    %233 = vmatpush2.msra.mxu0 %v232
    %v234 = vand.u32 %v84, 4294901760
    %235 = vmatprep.subr.mxu0 %v234
    %v236 = vand.u32 %v83, 4294901760
    %237 = vmatpush2.msra.mxu0 %v236
    %v238 = vand.u32 %v82, 4294901760
    %239 = vmatprep.subr.mxu0 %v238
    %v240 = vand.u32 %v81, 4294901760
    %241 = vmatpush2.msra.mxu0 %v240
    %v242 = vand.u32 %v80, 4294901760
    %243 = vmatprep.subr.mxu0 %v242
    %v244 = vand.u32 %v79, 4294901760
    %245 = vmatpush2.msra.mxu0 %v244
    %v246 = vand.u32 %v78, 4294901760
    %247 = vmatprep.subr.mxu0 %v246
    %v248 = vand.u32 %v77, 4294901760
    %249 = vmatpush2.msra.mxu0 %v248
    %v250 = vand.u32 %v119, 4294901760
    %v251 = vsub.f32 %v119, %v250
    %v252 = vand.u32 %v251, 4294901760
    %v253 = vsub.f32 %v251, %v252
    %v254 = vand.u32 %v253, 4294901760
    %255 = vmatprep.mubr.f32.mxu0 %v254
    %v256 = vand.u32 %v118, 4294901760
    %v257 = vsub.f32 %v118, %v256
    %v258 = vand.u32 %v257, 4294901760
    %v259 = vsub.f32 %v257, %v258
    %v260 = vand.u32 %v259, 4294901760
    %261 = vmatmul.mubr.f32.gmra.mxu0 %v260
    %v262 = vpop.f32.mrf.mxu0
    %v263 = vadd.f32 0.0, %v262
    %v264 = vpop.f32.mrf.mxu0
    %v265 = vadd.f32 0.0, %v264
    %266 = vdwg.mxu0
    %v267 = vand.u32 %v76, 4294901760
    %v268 = vsub.f32 %v76, %v267
    %v269 = vand.u32 %v268, 4294901760
    %v270 = vsub.f32 %v268, %v269
    %v271 = vand.u32 %v270, 4294901760
    %272 = vmatprep.subr.mxu0 %v271
    %v273 = vand.u32 %v75, 4294901760
    %v274 = vsub.f32 %v75, %v273
    %v275 = vand.u32 %v274, 4294901760
    %v276 = vsub.f32 %v274, %v275
    %v277 = vand.u32 %v276, 4294901760
    %278 = vmatpush1.msra.mxu0 %v277
    %v279 = vand.u32 %v74, 4294901760
    %v280 = vsub.f32 %v74, %v279
    %v281 = vand.u32 %v280, 4294901760
    %v282 = vsub.f32 %v280, %v281
    %v283 = vand.u32 %v282, 4294901760
    %284 = vmatprep.subr.mxu0 %v283
    %v285 = vand.u32 %v73, 4294901760
    %v286 = vsub.f32 %v73, %v285
    %v287 = vand.u32 %v286, 4294901760
    %v288 = vsub.f32 %v286, %v287
    %v289 = vand.u32 %v288, 4294901760
    %290 = vmatpush1.msra.mxu0 %v289
    %v291 = vand.u32 %v72, 4294901760
    %v292 = vsub.f32 %v72, %v291
    %v293 = vand.u32 %v292, 4294901760
    %v294 = vsub.f32 %v292, %v293
    %v295 = vand.u32 %v294, 4294901760
    %296 = vmatprep.subr.mxu0 %v295
    %v297 = vand.u32 %v71, 4294901760
    %v298 = vsub.f32 %v71, %v297
    %v299 = vand.u32 %v298, 4294901760
    %v300 = vsub.f32 %v298, %v299
    %v301 = vand.u32 %v300, 4294901760
    %302 = vmatpush1.msra.mxu0 %v301
    %v303 = vand.u32 %v70, 4294901760
    %v304 = vsub.f32 %v70, %v303
    %v305 = vand.u32 %v304, 4294901760
    %v306 = vsub.f32 %v304, %v305
    %v307 = vand.u32 %v306, 4294901760
    %308 = vmatprep.subr.mxu0 %v307
    %v309 = vand.u32 %v69, 4294901760
    %v310 = vsub.f32 %v69, %v309
    %v311 = vand.u32 %v310, 4294901760
    %v312 = vsub.f32 %v310, %v311
    %v313 = vand.u32 %v312, 4294901760
    %314 = vmatpush1.msra.mxu0 %v313
    %v315 = vand.u32 %v68, 4294901760
    %v316 = vsub.f32 %v68, %v315
    %v317 = vand.u32 %v316, 4294901760
    %v318 = vsub.f32 %v316, %v317
    %v319 = vand.u32 %v318, 4294901760
    %320 = vmatprep.subr.mxu0 %v319
    %v321 = vand.u32 %v67, 4294901760
    %v322 = vsub.f32 %v67, %v321
    %v323 = vand.u32 %v322, 4294901760
    %v324 = vsub.f32 %v322, %v323
    %v325 = vand.u32 %v324, 4294901760
    %326 = vmatpush1.msra.mxu0 %v325
    %v327 = vand.u32 %v66, 4294901760
    %v328 = vsub.f32 %v66, %v327
    %v329 = vand.u32 %v328, 4294901760
    %v330 = vsub.f32 %v328, %v329
    %v331 = vand.u32 %v330, 4294901760
    %332 = vmatprep.subr.mxu0 %v331
    %v333 = vand.u32 %v65, 4294901760
    %v334 = vsub.f32 %v65, %v333
    %v335 = vand.u32 %v334, 4294901760
    %v336 = vsub.f32 %v334, %v335
    %v337 = vand.u32 %v336, 4294901760
    %338 = vmatpush1.msra.mxu0 %v337
    %v339 = vand.u32 %v64, 4294901760
    %v340 = vsub.f32 %v64, %v339
    %v341 = vand.u32 %v340, 4294901760
    %v342 = vsub.f32 %v340, %v341
    %v343 = vand.u32 %v342, 4294901760
    %344 = vmatprep.subr.mxu0 %v343
    %v345 = vand.u32 %v63, 4294901760
    %v346 = vsub.f32 %v63, %v345
    %v347 = vand.u32 %v346, 4294901760
    %v348 = vsub.f32 %v346, %v347
    %v349 = vand.u32 %v348, 4294901760
    %350 = vmatpush1.msra.mxu0 %v349
    %v351 = vand.u32 %v62, 4294901760
    %v352 = vsub.f32 %v62, %v351
    %v353 = vand.u32 %v352, 4294901760
    %v354 = vsub.f32 %v352, %v353
    %v355 = vand.u32 %v354, 4294901760
    %356 = vmatprep.subr.mxu0 %v355
    %v357 = vand.u32 %v61, 4294901760
    %v358 = vsub.f32 %v61, %v357
    %v359 = vand.u32 %v358, 4294901760
    %v360 = vsub.f32 %v358, %v359
    %v361 = vand.u32 %v360, 4294901760
    %362 = vmatpush1.msra.mxu0 %v361
    %v363 = vand.u32 %v60, 4294901760
    %v364 = vsub.f32 %v60, %v363
    %v365 = vand.u32 %v364, 4294901760
    %v366 = vsub.f32 %v364, %v365
    %v367 = vand.u32 %v366, 4294901760
    %368 = vmatprep.subr.mxu0 %v367
    %v369 = vand.u32 %v59, 4294901760
    %v370 = vsub.f32 %v59, %v369
    %v371 = vand.u32 %v370, 4294901760
    %v372 = vsub.f32 %v370, %v371
    %v373 = vand.u32 %v372, 4294901760
    %374 = vmatpush1.msra.mxu0 %v373
    %v375 = vand.u32 %v58, 4294901760
    %v376 = vsub.f32 %v58, %v375
    %v377 = vand.u32 %v376, 4294901760
    %v378 = vsub.f32 %v376, %v377
    %v379 = vand.u32 %v378, 4294901760
    %380 = vmatprep.subr.mxu0 %v379
    %v381 = vand.u32 %v57, 4294901760
    %v382 = vsub.f32 %v57, %v381
    %v383 = vand.u32 %v382, 4294901760
    %v384 = vsub.f32 %v382, %v383
    %v385 = vand.u32 %v384, 4294901760
    %386 = vmatpush1.msra.mxu0 %v385
    %v387 = vand.u32 %v56, 4294901760
    %v388 = vsub.f32 %v56, %v387
    %v389 = vand.u32 %v388, 4294901760
    %v390 = vsub.f32 %v388, %v389
    %v391 = vand.u32 %v390, 4294901760
    %392 = vmatprep.subr.mxu0 %v391
    %v393 = vand.u32 %v55, 4294901760
    %v394 = vsub.f32 %v55, %v393
    %v395 = vand.u32 %v394, 4294901760
    %v396 = vsub.f32 %v394, %v395
    %v397 = vand.u32 %v396, 4294901760
    %398 = vmatpush1.msra.mxu0 %v397
    %v399 = vand.u32 %v54, 4294901760
    %v400 = vsub.f32 %v54, %v399
    %v401 = vand.u32 %v400, 4294901760
    %v402 = vsub.f32 %v400, %v401
    %v403 = vand.u32 %v402, 4294901760
    %404 = vmatprep.subr.mxu0 %v403
    %v405 = vand.u32 %v53, 4294901760
    %v406 = vsub.f32 %v53, %v405
    %v407 = vand.u32 %v406, 4294901760
    %v408 = vsub.f32 %v406, %v407
    %v409 = vand.u32 %v408, 4294901760
    %410 = vmatpush1.msra.mxu0 %v409
    %v411 = vand.u32 %v52, 4294901760
    %v412 = vsub.f32 %v52, %v411
    %v413 = vand.u32 %v412, 4294901760
    %v414 = vsub.f32 %v412, %v413
    %v415 = vand.u32 %v414, 4294901760
    %416 = vmatprep.subr.mxu0 %v415
    %v417 = vand.u32 %v51, 4294901760
    %v418 = vsub.f32 %v51, %v417
    %v419 = vand.u32 %v418, 4294901760
    %v420 = vsub.f32 %v418, %v419
    %v421 = vand.u32 %v420, 4294901760
    %422 = vmatpush1.msra.mxu0 %v421
    %v423 = vand.u32 %v50, 4294901760
    %v424 = vsub.f32 %v50, %v423
    %v425 = vand.u32 %v424, 4294901760
    %v426 = vsub.f32 %v424, %v425
    %v427 = vand.u32 %v426, 4294901760
    %428 = vmatprep.subr.mxu0 %v427
    %v429 = vand.u32 %v49, 4294901760
    %v430 = vsub.f32 %v49, %v429
    %v431 = vand.u32 %v430, 4294901760
    %v432 = vsub.f32 %v430, %v431
    %v433 = vand.u32 %v432, 4294901760
    %434 = vmatpush1.msra.mxu0 %v433
    %v435 = vand.u32 %v48, 4294901760
    %v436 = vsub.f32 %v48, %v435
    %v437 = vand.u32 %v436, 4294901760
    %v438 = vsub.f32 %v436, %v437
    %v439 = vand.u32 %v438, 4294901760
    %440 = vmatprep.subr.mxu0 %v439
    %v441 = vand.u32 %v47, 4294901760
    %v442 = vsub.f32 %v47, %v441
    %v443 = vand.u32 %v442, 4294901760
    %v444 = vsub.f32 %v442, %v443
    %v445 = vand.u32 %v444, 4294901760
    %446 = vmatpush1.msra.mxu0 %v445
    %v447 = vand.u32 %v46, 4294901760
    %v448 = vsub.f32 %v46, %v447
    %v449 = vand.u32 %v448, 4294901760
    %v450 = vsub.f32 %v448, %v449
    %v451 = vand.u32 %v450, 4294901760
    %452 = vmatprep.subr.mxu0 %v451
    %v453 = vand.u32 %v45, 4294901760
    %v454 = vsub.f32 %v45, %v453
    %v455 = vand.u32 %v454, 4294901760
    %v456 = vsub.f32 %v454, %v455
    %v457 = vand.u32 %v456, 4294901760
    %458 = vmatpush1.msra.mxu0 %v457
    %v459 = vand.u32 %v108, 4294901760
    %v460 = vsub.f32 %v108, %v459
    %v461 = vand.u32 %v460, 4294901760
    %v462 = vsub.f32 %v460, %v461
    %v463 = vand.u32 %v462, 4294901760
    %464 = vmatprep.subr.mxu0 %v463
    %v465 = vand.u32 %v107, 4294901760
    %v466 = vsub.f32 %v107, %v465
    %v467 = vand.u32 %v466, 4294901760
    %v468 = vsub.f32 %v466, %v467
    %v469 = vand.u32 %v468, 4294901760
    %470 = vmatpush2.msra.mxu0 %v469
    %v471 = vand.u32 %v106, 4294901760
    %v472 = vsub.f32 %v106, %v471
    %v473 = vand.u32 %v472, 4294901760
    %v474 = vsub.f32 %v472, %v473
    %v475 = vand.u32 %v474, 4294901760
    %476 = vmatprep.subr.mxu0 %v475
    %v477 = vand.u32 %v105, 4294901760
    %v478 = vsub.f32 %v105, %v477
    %v479 = vand.u32 %v478, 4294901760
    %v480 = vsub.f32 %v478, %v479
    %v481 = vand.u32 %v480, 4294901760
    %482 = vmatpush2.msra.mxu0 %v481
    %v483 = vand.u32 %v104, 4294901760
    %v484 = vsub.f32 %v104, %v483
    %v485 = vand.u32 %v484, 4294901760
    %v486 = vsub.f32 %v484, %v485
    %v487 = vand.u32 %v486, 4294901760
    %488 = vmatprep.subr.mxu0 %v487
    %v489 = vand.u32 %v103, 4294901760
    %v490 = vsub.f32 %v103, %v489
    %v491 = vand.u32 %v490, 4294901760
    %v492 = vsub.f32 %v490, %v491
    %v493 = vand.u32 %v492, 4294901760
    %494 = vmatpush2.msra.mxu0 %v493
    %v495 = vand.u32 %v102, 4294901760
    %v496 = vsub.f32 %v102, %v495
    %v497 = vand.u32 %v496, 4294901760
    %v498 = vsub.f32 %v496, %v497
    %v499 = vand.u32 %v498, 4294901760
    %500 = vmatprep.subr.mxu0 %v499
    %v501 = vand.u32 %v101, 4294901760
    %v502 = vsub.f32 %v101, %v501
    %v503 = vand.u32 %v502, 4294901760
    %v504 = vsub.f32 %v502, %v503
    %v505 = vand.u32 %v504, 4294901760
    %506 = vmatpush2.msra.mxu0 %v505
    %v507 = vand.u32 %v100, 4294901760
    %v508 = vsub.f32 %v100, %v507
    %v509 = vand.u32 %v508, 4294901760
    %v510 = vsub.f32 %v508, %v509
    %v511 = vand.u32 %v510, 4294901760
    %512 = vmatprep.subr.mxu0 %v511
    %v513 = vand.u32 %v99, 4294901760
    %v514 = vsub.f32 %v99, %v513
    %v515 = vand.u32 %v514, 4294901760
    %v516 = vsub.f32 %v514, %v515
    %v517 = vand.u32 %v516, 4294901760
    %518 = vmatpush2.msra.mxu0 %v517
    %v519 = vand.u32 %v98, 4294901760
    %v520 = vsub.f32 %v98, %v519
    %v521 = vand.u32 %v520, 4294901760
    %v522 = vsub.f32 %v520, %v521
    %v523 = vand.u32 %v522, 4294901760
    %524 = vmatprep.subr.mxu0 %v523
    %v525 = vand.u32 %v97, 4294901760
    %v526 = vsub.f32 %v97, %v525
    %v527 = vand.u32 %v526, 4294901760
    %v528 = vsub.f32 %v526, %v527
    %v529 = vand.u32 %v528, 4294901760
    %530 = vmatpush2.msra.mxu0 %v529
    %v531 = vand.u32 %v96, 4294901760
    %v532 = vsub.f32 %v96, %v531
    %v533 = vand.u32 %v532, 4294901760
    %v534 = vsub.f32 %v532, %v533
    %v535 = vand.u32 %v534, 4294901760
    %536 = vmatprep.subr.mxu0 %v535
    %v537 = vand.u32 %v95, 4294901760
    %v538 = vsub.f32 %v95, %v537
    %v539 = vand.u32 %v538, 4294901760
    %v540 = vsub.f32 %v538, %v539
    %v541 = vand.u32 %v540, 4294901760
    %542 = vmatpush2.msra.mxu0 %v541
    %v543 = vand.u32 %v94, 4294901760
    %v544 = vsub.f32 %v94, %v543
    %v545 = vand.u32 %v544, 4294901760
    %v546 = vsub.f32 %v544, %v545
    %v547 = vand.u32 %v546, 4294901760
    %548 = vmatprep.subr.mxu0 %v547
    %v549 = vand.u32 %v93, 4294901760
    %v550 = vsub.f32 %v93, %v549
    %v551 = vand.u32 %v550, 4294901760
    %v552 = vsub.f32 %v550, %v551
    %v553 = vand.u32 %v552, 4294901760
    %554 = vmatpush2.msra.mxu0 %v553
    %v555 = vand.u32 %v92, 4294901760
    %v556 = vsub.f32 %v92, %v555
    %v557 = vand.u32 %v556, 4294901760
    %v558 = vsub.f32 %v556, %v557
    %v559 = vand.u32 %v558, 4294901760
    %560 = vmatprep.subr.mxu0 %v559
    %v561 = vand.u32 %v91, 4294901760
    %v562 = vsub.f32 %v91, %v561
    %v563 = vand.u32 %v562, 4294901760
    %v564 = vsub.f32 %v562, %v563
    %v565 = vand.u32 %v564, 4294901760
    %566 = vmatpush2.msra.mxu0 %v565
    %v567 = vand.u32 %v90, 4294901760
    %v568 = vsub.f32 %v90, %v567
    %v569 = vand.u32 %v568, 4294901760
    %v570 = vsub.f32 %v568, %v569
    %v571 = vand.u32 %v570, 4294901760
    %572 = vmatprep.subr.mxu0 %v571
    %v573 = vand.u32 %v89, 4294901760
    %v574 = vsub.f32 %v89, %v573
    %v575 = vand.u32 %v574, 4294901760
    %v576 = vsub.f32 %v574, %v575
    %v577 = vand.u32 %v576, 4294901760
    %578 = vmatpush2.msra.mxu0 %v577
    %v579 = vand.u32 %v88, 4294901760
    %v580 = vsub.f32 %v88, %v579
    %v581 = vand.u32 %v580, 4294901760
    %v582 = vsub.f32 %v580, %v581
    %v583 = vand.u32 %v582, 4294901760
    %584 = vmatprep.subr.mxu0 %v583
    %v585 = vand.u32 %v87, 4294901760
    %v586 = vsub.f32 %v87, %v585
    %v587 = vand.u32 %v586, 4294901760
    %v588 = vsub.f32 %v586, %v587
    %v589 = vand.u32 %v588, 4294901760
    %590 = vmatpush2.msra.mxu0 %v589
    %v591 = vand.u32 %v86, 4294901760
    %v592 = vsub.f32 %v86, %v591
    %v593 = vand.u32 %v592, 4294901760
    %v594 = vsub.f32 %v592, %v593
    %v595 = vand.u32 %v594, 4294901760
    %596 = vmatprep.subr.mxu0 %v595
    %v597 = vand.u32 %v85, 4294901760
    %v598 = vsub.f32 %v85, %v597
    %v599 = vand.u32 %v598, 4294901760
    %v600 = vsub.f32 %v598, %v599
    %v601 = vand.u32 %v600, 4294901760
    %602 = vmatpush2.msra.mxu0 %v601
    %v603 = vand.u32 %v84, 4294901760
    %v604 = vsub.f32 %v84, %v603
    %v605 = vand.u32 %v604, 4294901760
    %v606 = vsub.f32 %v604, %v605
    %v607 = vand.u32 %v606, 4294901760
    %608 = vmatprep.subr.mxu0 %v607
    %v609 = vand.u32 %v83, 4294901760
    %v610 = vsub.f32 %v83, %v609
    %v611 = vand.u32 %v610, 4294901760
    %v612 = vsub.f32 %v610, %v611
    %v613 = vand.u32 %v612, 4294901760
    %614 = vmatpush2.msra.mxu0 %v613
    %v615 = vand.u32 %v82, 4294901760
    %v616 = vsub.f32 %v82, %v615
    %v617 = vand.u32 %v616, 4294901760
    %v618 = vsub.f32 %v616, %v617
    %v619 = vand.u32 %v618, 4294901760
    %620 = vmatprep.subr.mxu0 %v619
    %v621 = vand.u32 %v81, 4294901760
    %v622 = vsub.f32 %v81, %v621
    %v623 = vand.u32 %v622, 4294901760
    %v624 = vsub.f32 %v622, %v623
    %v625 = vand.u32 %v624, 4294901760
    %626 = vmatpush2.msra.mxu0 %v625
    %v627 = vand.u32 %v80, 4294901760
    %v628 = vsub.f32 %v80, %v627
    %v629 = vand.u32 %v628, 4294901760
    %v630 = vsub.f32 %v628, %v629
    %v631 = vand.u32 %v630, 4294901760
    %632 = vmatprep.subr.mxu0 %v631
    %v633 = vand.u32 %v79, 4294901760
    %v634 = vsub.f32 %v79, %v633
    %v635 = vand.u32 %v634, 4294901760
    %v636 = vsub.f32 %v634, %v635
    %v637 = vand.u32 %v636, 4294901760
    %638 = vmatpush2.msra.mxu0 %v637
    %v639 = vand.u32 %v78, 4294901760
    %v640 = vsub.f32 %v78, %v639
    %v641 = vand.u32 %v640, 4294901760
    %v642 = vsub.f32 %v640, %v641
    %v643 = vand.u32 %v642, 4294901760
    %644 = vmatprep.subr.mxu0 %v643
    %v645 = vand.u32 %v77, 4294901760
    %v646 = vsub.f32 %v77, %v645
    %v647 = vand.u32 %v646, 4294901760
    %v648 = vsub.f32 %v646, %v647
    %v649 = vand.u32 %v648, 4294901760
    %650 = vmatpush2.msra.mxu0 %v649
    %v651 = vand.u32 %v119, 4294901760
    %652 = vmatprep.mubr.f32.mxu0 %v651
    %v653 = vand.u32 %v118, 4294901760
    %654 = vmatmul.mubr.f32.gmra.mxu0 %v653
    %v655 = vpop.f32.mrf.mxu0
    %v656 = vadd.f32 %v263, %v655
    %v657 = vpop.f32.mrf.mxu0
    %v658 = vadd.f32 %v265, %v657
    %659 = vdwg.mxu0
    %v660 = vand.u32 %v76, 4294901760
    %v661 = vsub.f32 %v76, %v660
    %662 = vmatprep.subr.mxu0 %v661
    %v663 = vand.u32 %v75, 4294901760
    %v664 = vsub.f32 %v75, %v663
    %665 = vmatpush1.msra.mxu0 %v664
    %v666 = vand.u32 %v74, 4294901760
    %v667 = vsub.f32 %v74, %v666
    %668 = vmatprep.subr.mxu0 %v667
    %v669 = vand.u32 %v73, 4294901760
    %v670 = vsub.f32 %v73, %v669
    %671 = vmatpush1.msra.mxu0 %v670
    %v672 = vand.u32 %v72, 4294901760
    %v673 = vsub.f32 %v72, %v672
    %674 = vmatprep.subr.mxu0 %v673
    %v675 = vand.u32 %v71, 4294901760
    %v676 = vsub.f32 %v71, %v675
    %677 = vmatpush1.msra.mxu0 %v676
    %v678 = vand.u32 %v70, 4294901760
    %v679 = vsub.f32 %v70, %v678
    %680 = vmatprep.subr.mxu0 %v679
    %v681 = vand.u32 %v69, 4294901760
    %v682 = vsub.f32 %v69, %v681
    %683 = vmatpush1.msra.mxu0 %v682
    %v684 = vand.u32 %v68, 4294901760
    %v685 = vsub.f32 %v68, %v684
    %686 = vmatprep.subr.mxu0 %v685
    %v687 = vand.u32 %v67, 4294901760
    %v688 = vsub.f32 %v67, %v687
    %689 = vmatpush1.msra.mxu0 %v688
    %v690 = vand.u32 %v66, 4294901760
    %v691 = vsub.f32 %v66, %v690
    %692 = vmatprep.subr.mxu0 %v691
    %v693 = vand.u32 %v65, 4294901760
    %v694 = vsub.f32 %v65, %v693
    %695 = vmatpush1.msra.mxu0 %v694
    %v696 = vand.u32 %v64, 4294901760
    %v697 = vsub.f32 %v64, %v696
    %698 = vmatprep.subr.mxu0 %v697
    %v699 = vand.u32 %v63, 4294901760
    %v700 = vsub.f32 %v63, %v699
    %701 = vmatpush1.msra.mxu0 %v700
    %v702 = vand.u32 %v62, 4294901760
    %v703 = vsub.f32 %v62, %v702
    %704 = vmatprep.subr.mxu0 %v703
    %v705 = vand.u32 %v61, 4294901760
    %v706 = vsub.f32 %v61, %v705
    %707 = vmatpush1.msra.mxu0 %v706
    %v708 = vand.u32 %v60, 4294901760
    %v709 = vsub.f32 %v60, %v708
    %710 = vmatprep.subr.mxu0 %v709
    %v711 = vand.u32 %v59, 4294901760
    %v712 = vsub.f32 %v59, %v711
    %713 = vmatpush1.msra.mxu0 %v712
    %v714 = vand.u32 %v58, 4294901760
    %v715 = vsub.f32 %v58, %v714
    %716 = vmatprep.subr.mxu0 %v715
    %v717 = vand.u32 %v57, 4294901760
    %v718 = vsub.f32 %v57, %v717
    %719 = vmatpush1.msra.mxu0 %v718
    %v720 = vand.u32 %v56, 4294901760
    %v721 = vsub.f32 %v56, %v720
    %722 = vmatprep.subr.mxu0 %v721
    %v723 = vand.u32 %v55, 4294901760
    %v724 = vsub.f32 %v55, %v723
    %725 = vmatpush1.msra.mxu0 %v724
    %v726 = vand.u32 %v54, 4294901760
    %v727 = vsub.f32 %v54, %v726
    %728 = vmatprep.subr.mxu0 %v727
    %v729 = vand.u32 %v53, 4294901760
    %v730 = vsub.f32 %v53, %v729
    %731 = vmatpush1.msra.mxu0 %v730
    %v732 = vand.u32 %v52, 4294901760
    %v733 = vsub.f32 %v52, %v732
    %734 = vmatprep.subr.mxu0 %v733
    %v735 = vand.u32 %v51, 4294901760
    %v736 = vsub.f32 %v51, %v735
    %737 = vmatpush1.msra.mxu0 %v736
    %v738 = vand.u32 %v50, 4294901760
    %v739 = vsub.f32 %v50, %v738
    %740 = vmatprep.subr.mxu0 %v739
    %v741 = vand.u32 %v49, 4294901760
    %v742 = vsub.f32 %v49, %v741
    %743 = vmatpush1.msra.mxu0 %v742
    %v744 = vand.u32 %v48, 4294901760
    %v745 = vsub.f32 %v48, %v744
    %746 = vmatprep.subr.mxu0 %v745
    %v747 = vand.u32 %v47, 4294901760
    %v748 = vsub.f32 %v47, %v747
    %749 = vmatpush1.msra.mxu0 %v748
    %v750 = vand.u32 %v46, 4294901760
    %v751 = vsub.f32 %v46, %v750
    %752 = vmatprep.subr.mxu0 %v751
    %v753 = vand.u32 %v45, 4294901760
    %v754 = vsub.f32 %v45, %v753
    %755 = vmatpush1.msra.mxu0 %v754
    %v756 = vand.u32 %v108, 4294901760
    %v757 = vsub.f32 %v108, %v756
    %758 = vmatprep.subr.mxu0 %v757
    %v759 = vand.u32 %v107, 4294901760
    %v760 = vsub.f32 %v107, %v759
    %761 = vmatpush2.msra.mxu0 %v760
    %v762 = vand.u32 %v106, 4294901760
    %v763 = vsub.f32 %v106, %v762
    %764 = vmatprep.subr.mxu0 %v763
    %v765 = vand.u32 %v105, 4294901760
    %v766 = vsub.f32 %v105, %v765
    %767 = vmatpush2.msra.mxu0 %v766
    %v768 = vand.u32 %v104, 4294901760
    %v769 = vsub.f32 %v104, %v768
    %770 = vmatprep.subr.mxu0 %v769
    %v771 = vand.u32 %v103, 4294901760
    %v772 = vsub.f32 %v103, %v771
    %773 = vmatpush2.msra.mxu0 %v772
    %v774 = vand.u32 %v102, 4294901760
    %v775 = vsub.f32 %v102, %v774
    %776 = vmatprep.subr.mxu0 %v775
    %v777 = vand.u32 %v101, 4294901760
    %v778 = vsub.f32 %v101, %v777
    %779 = vmatpush2.msra.mxu0 %v778
    %v780 = vand.u32 %v100, 4294901760
    %v781 = vsub.f32 %v100, %v780
    %782 = vmatprep.subr.mxu0 %v781
    %v783 = vand.u32 %v99, 4294901760
    %v784 = vsub.f32 %v99, %v783
    %785 = vmatpush2.msra.mxu0 %v784
    %v786 = vand.u32 %v98, 4294901760
    %v787 = vsub.f32 %v98, %v786
    %788 = vmatprep.subr.mxu0 %v787
    %v789 = vand.u32 %v97, 4294901760
    %v790 = vsub.f32 %v97, %v789
    %791 = vmatpush2.msra.mxu0 %v790
    %v792 = vand.u32 %v96, 4294901760
    %v793 = vsub.f32 %v96, %v792
    %794 = vmatprep.subr.mxu0 %v793
    %v795 = vand.u32 %v95, 4294901760
    %v796 = vsub.f32 %v95, %v795
    %797 = vmatpush2.msra.mxu0 %v796
    %v798 = vand.u32 %v94, 4294901760
    %v799 = vsub.f32 %v94, %v798
    %800 = vmatprep.subr.mxu0 %v799
    %v801 = vand.u32 %v93, 4294901760
    %v802 = vsub.f32 %v93, %v801
    %803 = vmatpush2.msra.mxu0 %v802
    %v804 = vand.u32 %v92, 4294901760
    %v805 = vsub.f32 %v92, %v804
    %806 = vmatprep.subr.mxu0 %v805
    %v807 = vand.u32 %v91, 4294901760
    %v808 = vsub.f32 %v91, %v807
    %809 = vmatpush2.msra.mxu0 %v808
    %v810 = vand.u32 %v90, 4294901760
    %v811 = vsub.f32 %v90, %v810
    %812 = vmatprep.subr.mxu0 %v811
    %v813 = vand.u32 %v89, 4294901760
    %v814 = vsub.f32 %v89, %v813
    %815 = vmatpush2.msra.mxu0 %v814
    %v816 = vand.u32 %v88, 4294901760
    %v817 = vsub.f32 %v88, %v816
    %818 = vmatprep.subr.mxu0 %v817
    %v819 = vand.u32 %v87, 4294901760
    %v820 = vsub.f32 %v87, %v819
    %821 = vmatpush2.msra.mxu0 %v820
    %v822 = vand.u32 %v86, 4294901760
    %v823 = vsub.f32 %v86, %v822
    %824 = vmatprep.subr.mxu0 %v823
    %v825 = vand.u32 %v85, 4294901760
    %v826 = vsub.f32 %v85, %v825
    %827 = vmatpush2.msra.mxu0 %v826
    %v828 = vand.u32 %v84, 4294901760
    %v829 = vsub.f32 %v84, %v828
    %830 = vmatprep.subr.mxu0 %v829
    %v831 = vand.u32 %v83, 4294901760
    %v832 = vsub.f32 %v83, %v831
    %833 = vmatpush2.msra.mxu0 %v832
    %v834 = vand.u32 %v82, 4294901760
    %v835 = vsub.f32 %v82, %v834
    %836 = vmatprep.subr.mxu0 %v835
    %v837 = vand.u32 %v81, 4294901760
    %v838 = vsub.f32 %v81, %v837
    %839 = vmatpush2.msra.mxu0 %v838
    %v840 = vand.u32 %v80, 4294901760
    %v841 = vsub.f32 %v80, %v840
    %842 = vmatprep.subr.mxu0 %v841
    %v843 = vand.u32 %v79, 4294901760
    %v844 = vsub.f32 %v79, %v843
    %845 = vmatpush2.msra.mxu0 %v844
    %v846 = vand.u32 %v78, 4294901760
    %v847 = vsub.f32 %v78, %v846
    %848 = vmatprep.subr.mxu0 %v847
    %v849 = vand.u32 %v77, 4294901760
    %v850 = vsub.f32 %v77, %v849
    %851 = vmatpush2.msra.mxu0 %v850
    %v852 = vand.u32 %v119, 4294901760
    %v853 = vsub.f32 %v119, %v852
    %854 = vmatprep.mubr.f32.mxu0 %v853
    %v855 = vand.u32 %v118, 4294901760
    %v856 = vsub.f32 %v118, %v855
    %857 = vmatmul.mubr.f32.gmra.mxu0 %v856
    %v858 = vpop.f32.mrf.mxu0
    %v859 = vadd.f32 %v656, %v858
    %v860 = vpop.f32.mrf.mxu0
    %v861 = vadd.f32 %v658, %v860
    %862 = vdwg.mxu0
    %v863 = vand.u32 %v76, 4294901760
    %864 = vmatprep.subr.mxu0 %v863
    %v865 = vand.u32 %v75, 4294901760
    %866 = vmatpush1.msra.mxu0 %v865
    %v867 = vand.u32 %v74, 4294901760
    %868 = vmatprep.subr.mxu0 %v867
    %v869 = vand.u32 %v73, 4294901760
    %870 = vmatpush1.msra.mxu0 %v869
    %v871 = vand.u32 %v72, 4294901760
    %872 = vmatprep.subr.mxu0 %v871
    %v873 = vand.u32 %v71, 4294901760
    %874 = vmatpush1.msra.mxu0 %v873
    %v875 = vand.u32 %v70, 4294901760
    %876 = vmatprep.subr.mxu0 %v875
    %v877 = vand.u32 %v69, 4294901760
    %878 = vmatpush1.msra.mxu0 %v877
    %v879 = vand.u32 %v68, 4294901760
    %880 = vmatprep.subr.mxu0 %v879
    %v881 = vand.u32 %v67, 4294901760
    %882 = vmatpush1.msra.mxu0 %v881
    %v883 = vand.u32 %v66, 4294901760
    %884 = vmatprep.subr.mxu0 %v883
    %v885 = vand.u32 %v65, 4294901760
    %886 = vmatpush1.msra.mxu0 %v885
    %v887 = vand.u32 %v64, 4294901760
    %888 = vmatprep.subr.mxu0 %v887
    %v889 = vand.u32 %v63, 4294901760
    %890 = vmatpush1.msra.mxu0 %v889
    %v891 = vand.u32 %v62, 4294901760
    %892 = vmatprep.subr.mxu0 %v891
    %v893 = vand.u32 %v61, 4294901760
    %894 = vmatpush1.msra.mxu0 %v893
    %v895 = vand.u32 %v60, 4294901760
    %896 = vmatprep.subr.mxu0 %v895
    %v897 = vand.u32 %v59, 4294901760
    %898 = vmatpush1.msra.mxu0 %v897
    %v899 = vand.u32 %v58, 4294901760
    %900 = vmatprep.subr.mxu0 %v899
    %v901 = vand.u32 %v57, 4294901760
    %902 = vmatpush1.msra.mxu0 %v901
    %v903 = vand.u32 %v56, 4294901760
    %904 = vmatprep.subr.mxu0 %v903
    %v905 = vand.u32 %v55, 4294901760
    %906 = vmatpush1.msra.mxu0 %v905
    %v907 = vand.u32 %v54, 4294901760
    %908 = vmatprep.subr.mxu0 %v907
    %v909 = vand.u32 %v53, 4294901760
    %910 = vmatpush1.msra.mxu0 %v909
    %v911 = vand.u32 %v52, 4294901760
    %912 = vmatprep.subr.mxu0 %v911
    %v913 = vand.u32 %v51, 4294901760
    %914 = vmatpush1.msra.mxu0 %v913
    %v915 = vand.u32 %v50, 4294901760
    %916 = vmatprep.subr.mxu0 %v915
    %v917 = vand.u32 %v49, 4294901760
    %918 = vmatpush1.msra.mxu0 %v917
    %v919 = vand.u32 %v48, 4294901760
    %920 = vmatprep.subr.mxu0 %v919
    %v921 = vand.u32 %v47, 4294901760
    %922 = vmatpush1.msra.mxu0 %v921
    %v923 = vand.u32 %v46, 4294901760
    %924 = vmatprep.subr.mxu0 %v923
    %v925 = vand.u32 %v45, 4294901760
    %926 = vmatpush1.msra.mxu0 %v925
    %v927 = vand.u32 %v108, 4294901760
    %928 = vmatprep.subr.mxu0 %v927
    %v929 = vand.u32 %v107, 4294901760
    %930 = vmatpush2.msra.mxu0 %v929
    %v931 = vand.u32 %v106, 4294901760
    %932 = vmatprep.subr.mxu0 %v931
    %v933 = vand.u32 %v105, 4294901760
    %934 = vmatpush2.msra.mxu0 %v933
    %v935 = vand.u32 %v104, 4294901760
    %936 = vmatprep.subr.mxu0 %v935
    %v937 = vand.u32 %v103, 4294901760
    %938 = vmatpush2.msra.mxu0 %v937
    %v939 = vand.u32 %v102, 4294901760
    %940 = vmatprep.subr.mxu0 %v939
    %v941 = vand.u32 %v101, 4294901760
    %942 = vmatpush2.msra.mxu0 %v941
    %v943 = vand.u32 %v100, 4294901760
    %944 = vmatprep.subr.mxu0 %v943
    %v945 = vand.u32 %v99, 4294901760
    %946 = vmatpush2.msra.mxu0 %v945
    %v947 = vand.u32 %v98, 4294901760
    %948 = vmatprep.subr.mxu0 %v947
    %v949 = vand.u32 %v97, 4294901760
    %950 = vmatpush2.msra.mxu0 %v949
    %v951 = vand.u32 %v96, 4294901760
    %952 = vmatprep.subr.mxu0 %v951
    %v953 = vand.u32 %v95, 4294901760
    %954 = vmatpush2.msra.mxu0 %v953
    %v955 = vand.u32 %v94, 4294901760
    %956 = vmatprep.subr.mxu0 %v955
    %v957 = vand.u32 %v93, 4294901760
    %958 = vmatpush2.msra.mxu0 %v957
    %v959 = vand.u32 %v92, 4294901760
    %960 = vmatprep.subr.mxu0 %v959
    %v961 = vand.u32 %v91, 4294901760
    %962 = vmatpush2.msra.mxu0 %v961
    %v963 = vand.u32 %v90, 4294901760
    %964 = vmatprep.subr.mxu0 %v963
    %v965 = vand.u32 %v89, 4294901760
    %966 = vmatpush2.msra.mxu0 %v965
    %v967 = vand.u32 %v88, 4294901760
    %968 = vmatprep.subr.mxu0 %v967
    %v969 = vand.u32 %v87, 4294901760
    %970 = vmatpush2.msra.mxu0 %v969
    %v971 = vand.u32 %v86, 4294901760
    %972 = vmatprep.subr.mxu0 %v971
    %v973 = vand.u32 %v85, 4294901760
    %974 = vmatpush2.msra.mxu0 %v973
    %v975 = vand.u32 %v84, 4294901760
    %976 = vmatprep.subr.mxu0 %v975
    %v977 = vand.u32 %v83, 4294901760
    %978 = vmatpush2.msra.mxu0 %v977
    %v979 = vand.u32 %v82, 4294901760
    %980 = vmatprep.subr.mxu0 %v979
    %v981 = vand.u32 %v81, 4294901760
    %982 = vmatpush2.msra.mxu0 %v981
    %v983 = vand.u32 %v80, 4294901760
    %984 = vmatprep.subr.mxu0 %v983
    %v985 = vand.u32 %v79, 4294901760
    %986 = vmatpush2.msra.mxu0 %v985
    %v987 = vand.u32 %v78, 4294901760
    %988 = vmatprep.subr.mxu0 %v987
    %v989 = vand.u32 %v77, 4294901760
    %990 = vmatpush2.msra.mxu0 %v989
    %v991 = vand.u32 %v119, 4294901760
    %v992 = vsub.f32 %v119, %v991
    %v993 = vand.u32 %v992, 4294901760
    %994 = vmatprep.mubr.f32.mxu0 %v993
    %v995 = vand.u32 %v118, 4294901760
    %v996 = vsub.f32 %v118, %v995
    %v997 = vand.u32 %v996, 4294901760
    %998 = vmatmul.mubr.f32.gmra.mxu0 %v997
    %v999 = vpop.f32.mrf.mxu0
    %v1000 = vadd.f32 %v859, %v999
    %v1001 = vpop.f32.mrf.mxu0
    %v1002 = vadd.f32 %v861, %v1001
    %1003 = vdwg.mxu0
    %v1004 = vand.u32 %v76, 4294901760
    %v1005 = vsub.f32 %v76, %v1004
    %v1006 = vand.u32 %v1005, 4294901760
    %1007 = vmatprep.subr.mxu0 %v1006
    %v1008 = vand.u32 %v75, 4294901760
    %v1009 = vsub.f32 %v75, %v1008
    %v1010 = vand.u32 %v1009, 4294901760
    %1011 = vmatpush1.msra.mxu0 %v1010
    %v1012 = vand.u32 %v74, 4294901760
    %v1013 = vsub.f32 %v74, %v1012
    %v1014 = vand.u32 %v1013, 4294901760
    %1015 = vmatprep.subr.mxu0 %v1014
    %v1016 = vand.u32 %v73, 4294901760
    %v1017 = vsub.f32 %v73, %v1016
    %v1018 = vand.u32 %v1017, 4294901760
    %1019 = vmatpush1.msra.mxu0 %v1018
    %v1020 = vand.u32 %v72, 4294901760
    %v1021 = vsub.f32 %v72, %v1020
    %v1022 = vand.u32 %v1021, 4294901760
    %1023 = vmatprep.subr.mxu0 %v1022
    %v1024 = vand.u32 %v71, 4294901760
    %v1025 = vsub.f32 %v71, %v1024
    %v1026 = vand.u32 %v1025, 4294901760
    %1027 = vmatpush1.msra.mxu0 %v1026
    %v1028 = vand.u32 %v70, 4294901760
    %v1029 = vsub.f32 %v70, %v1028
    %v1030 = vand.u32 %v1029, 4294901760
    %1031 = vmatprep.subr.mxu0 %v1030
    %v1032 = vand.u32 %v69, 4294901760
    %v1033 = vsub.f32 %v69, %v1032
    %v1034 = vand.u32 %v1033, 4294901760
    %1035 = vmatpush1.msra.mxu0 %v1034
    %v1036 = vand.u32 %v68, 4294901760
    %v1037 = vsub.f32 %v68, %v1036
    %v1038 = vand.u32 %v1037, 4294901760
    %1039 = vmatprep.subr.mxu0 %v1038
    %v1040 = vand.u32 %v67, 4294901760
    %v1041 = vsub.f32 %v67, %v1040
    %v1042 = vand.u32 %v1041, 4294901760
    %1043 = vmatpush1.msra.mxu0 %v1042
    %v1044 = vand.u32 %v66, 4294901760
    %v1045 = vsub.f32 %v66, %v1044
    %v1046 = vand.u32 %v1045, 4294901760
    %1047 = vmatprep.subr.mxu0 %v1046
    %v1048 = vand.u32 %v65, 4294901760
    %v1049 = vsub.f32 %v65, %v1048
    %v1050 = vand.u32 %v1049, 4294901760
    %1051 = vmatpush1.msra.mxu0 %v1050
    %v1052 = vand.u32 %v64, 4294901760
    %v1053 = vsub.f32 %v64, %v1052
    %v1054 = vand.u32 %v1053, 4294901760
    %1055 = vmatprep.subr.mxu0 %v1054
    %v1056 = vand.u32 %v63, 4294901760
    %v1057 = vsub.f32 %v63, %v1056
    %v1058 = vand.u32 %v1057, 4294901760
    %1059 = vmatpush1.msra.mxu0 %v1058
    %v1060 = vand.u32 %v62, 4294901760
    %v1061 = vsub.f32 %v62, %v1060
    %v1062 = vand.u32 %v1061, 4294901760
    %1063 = vmatprep.subr.mxu0 %v1062
    %v1064 = vand.u32 %v61, 4294901760
    %v1065 = vsub.f32 %v61, %v1064
    %v1066 = vand.u32 %v1065, 4294901760
    %1067 = vmatpush1.msra.mxu0 %v1066
    %v1068 = vand.u32 %v60, 4294901760
    %v1069 = vsub.f32 %v60, %v1068
    %v1070 = vand.u32 %v1069, 4294901760
    %1071 = vmatprep.subr.mxu0 %v1070
    %v1072 = vand.u32 %v59, 4294901760
    %v1073 = vsub.f32 %v59, %v1072
    %v1074 = vand.u32 %v1073, 4294901760
    %1075 = vmatpush1.msra.mxu0 %v1074
    %v1076 = vand.u32 %v58, 4294901760
    %v1077 = vsub.f32 %v58, %v1076
    %v1078 = vand.u32 %v1077, 4294901760
    %1079 = vmatprep.subr.mxu0 %v1078
    %v1080 = vand.u32 %v57, 4294901760
    %v1081 = vsub.f32 %v57, %v1080
    %v1082 = vand.u32 %v1081, 4294901760
    %1083 = vmatpush1.msra.mxu0 %v1082
    %v1084 = vand.u32 %v56, 4294901760
    %v1085 = vsub.f32 %v56, %v1084
    %v1086 = vand.u32 %v1085, 4294901760
    %1087 = vmatprep.subr.mxu0 %v1086
    %v1088 = vand.u32 %v55, 4294901760
    %v1089 = vsub.f32 %v55, %v1088
    %v1090 = vand.u32 %v1089, 4294901760
    %1091 = vmatpush1.msra.mxu0 %v1090
    %v1092 = vand.u32 %v54, 4294901760
    %v1093 = vsub.f32 %v54, %v1092
    %v1094 = vand.u32 %v1093, 4294901760
    %1095 = vmatprep.subr.mxu0 %v1094
    %v1096 = vand.u32 %v53, 4294901760
    %v1097 = vsub.f32 %v53, %v1096
    %v1098 = vand.u32 %v1097, 4294901760
    %1099 = vmatpush1.msra.mxu0 %v1098
    %v1100 = vand.u32 %v52, 4294901760
    %v1101 = vsub.f32 %v52, %v1100
    %v1102 = vand.u32 %v1101, 4294901760
    %1103 = vmatprep.subr.mxu0 %v1102
    %v1104 = vand.u32 %v51, 4294901760
    %v1105 = vsub.f32 %v51, %v1104
    %v1106 = vand.u32 %v1105, 4294901760
    %1107 = vmatpush1.msra.mxu0 %v1106
    %v1108 = vand.u32 %v50, 4294901760
    %v1109 = vsub.f32 %v50, %v1108
    %v1110 = vand.u32 %v1109, 4294901760
    %1111 = vmatprep.subr.mxu0 %v1110
    %v1112 = vand.u32 %v49, 4294901760
    %v1113 = vsub.f32 %v49, %v1112
    %v1114 = vand.u32 %v1113, 4294901760
    %1115 = vmatpush1.msra.mxu0 %v1114
    %v1116 = vand.u32 %v48, 4294901760
    %v1117 = vsub.f32 %v48, %v1116
    %v1118 = vand.u32 %v1117, 4294901760
    %1119 = vmatprep.subr.mxu0 %v1118
    %v1120 = vand.u32 %v47, 4294901760
    %v1121 = vsub.f32 %v47, %v1120
    %v1122 = vand.u32 %v1121, 4294901760
    %1123 = vmatpush1.msra.mxu0 %v1122
    %v1124 = vand.u32 %v46, 4294901760
    %v1125 = vsub.f32 %v46, %v1124
    %v1126 = vand.u32 %v1125, 4294901760
    %1127 = vmatprep.subr.mxu0 %v1126
    %v1128 = vand.u32 %v45, 4294901760
    %v1129 = vsub.f32 %v45, %v1128
    %v1130 = vand.u32 %v1129, 4294901760
    %1131 = vmatpush1.msra.mxu0 %v1130
    %v1132 = vand.u32 %v108, 4294901760
    %v1133 = vsub.f32 %v108, %v1132
    %v1134 = vand.u32 %v1133, 4294901760
    %1135 = vmatprep.subr.mxu0 %v1134
    %v1136 = vand.u32 %v107, 4294901760
    %v1137 = vsub.f32 %v107, %v1136
    %v1138 = vand.u32 %v1137, 4294901760
    %1139 = vmatpush2.msra.mxu0 %v1138
    %v1140 = vand.u32 %v106, 4294901760
    %v1141 = vsub.f32 %v106, %v1140
    %v1142 = vand.u32 %v1141, 4294901760
    %1143 = vmatprep.subr.mxu0 %v1142
    %v1144 = vand.u32 %v105, 4294901760
    %v1145 = vsub.f32 %v105, %v1144
    %v1146 = vand.u32 %v1145, 4294901760
    %1147 = vmatpush2.msra.mxu0 %v1146
    %v1148 = vand.u32 %v104, 4294901760
    %v1149 = vsub.f32 %v104, %v1148
    %v1150 = vand.u32 %v1149, 4294901760
    %1151 = vmatprep.subr.mxu0 %v1150
    %v1152 = vand.u32 %v103, 4294901760
    %v1153 = vsub.f32 %v103, %v1152
    %v1154 = vand.u32 %v1153, 4294901760
    %1155 = vmatpush2.msra.mxu0 %v1154
    %v1156 = vand.u32 %v102, 4294901760
    %v1157 = vsub.f32 %v102, %v1156
    %v1158 = vand.u32 %v1157, 4294901760
    %1159 = vmatprep.subr.mxu0 %v1158
    %v1160 = vand.u32 %v101, 4294901760
    %v1161 = vsub.f32 %v101, %v1160
    %v1162 = vand.u32 %v1161, 4294901760
    %1163 = vmatpush2.msra.mxu0 %v1162
    %v1164 = vand.u32 %v100, 4294901760
    %v1165 = vsub.f32 %v100, %v1164
    %v1166 = vand.u32 %v1165, 4294901760
    %1167 = vmatprep.subr.mxu0 %v1166
    %v1168 = vand.u32 %v99, 4294901760
    %v1169 = vsub.f32 %v99, %v1168
    %v1170 = vand.u32 %v1169, 4294901760
    %1171 = vmatpush2.msra.mxu0 %v1170
    %v1172 = vand.u32 %v98, 4294901760
    %v1173 = vsub.f32 %v98, %v1172
    %v1174 = vand.u32 %v1173, 4294901760
    %1175 = vmatprep.subr.mxu0 %v1174
    %v1176 = vand.u32 %v97, 4294901760
    %v1177 = vsub.f32 %v97, %v1176
    %v1178 = vand.u32 %v1177, 4294901760
    %1179 = vmatpush2.msra.mxu0 %v1178
    %v1180 = vand.u32 %v96, 4294901760
    %v1181 = vsub.f32 %v96, %v1180
    %v1182 = vand.u32 %v1181, 4294901760
    %1183 = vmatprep.subr.mxu0 %v1182
    %v1184 = vand.u32 %v95, 4294901760
    %v1185 = vsub.f32 %v95, %v1184
    %v1186 = vand.u32 %v1185, 4294901760
    %1187 = vmatpush2.msra.mxu0 %v1186
    %v1188 = vand.u32 %v94, 4294901760
    %v1189 = vsub.f32 %v94, %v1188
    %v1190 = vand.u32 %v1189, 4294901760
    %1191 = vmatprep.subr.mxu0 %v1190
    %v1192 = vand.u32 %v93, 4294901760
    %v1193 = vsub.f32 %v93, %v1192
    %v1194 = vand.u32 %v1193, 4294901760
    %1195 = vmatpush2.msra.mxu0 %v1194
    %v1196 = vand.u32 %v92, 4294901760
    %v1197 = vsub.f32 %v92, %v1196
    %v1198 = vand.u32 %v1197, 4294901760
    %1199 = vmatprep.subr.mxu0 %v1198
    %v1200 = vand.u32 %v91, 4294901760
    %v1201 = vsub.f32 %v91, %v1200
    %v1202 = vand.u32 %v1201, 4294901760
    %1203 = vmatpush2.msra.mxu0 %v1202
    %v1204 = vand.u32 %v90, 4294901760
    %v1205 = vsub.f32 %v90, %v1204
    %v1206 = vand.u32 %v1205, 4294901760
    %1207 = vmatprep.subr.mxu0 %v1206
    %v1208 = vand.u32 %v89, 4294901760
    %v1209 = vsub.f32 %v89, %v1208
    %v1210 = vand.u32 %v1209, 4294901760
    %1211 = vmatpush2.msra.mxu0 %v1210
    %v1212 = vand.u32 %v88, 4294901760
    %v1213 = vsub.f32 %v88, %v1212
    %v1214 = vand.u32 %v1213, 4294901760
    %1215 = vmatprep.subr.mxu0 %v1214
    %v1216 = vand.u32 %v87, 4294901760
    %v1217 = vsub.f32 %v87, %v1216
    %v1218 = vand.u32 %v1217, 4294901760
    %1219 = vmatpush2.msra.mxu0 %v1218
    %v1220 = vand.u32 %v86, 4294901760
    %v1221 = vsub.f32 %v86, %v1220
    %v1222 = vand.u32 %v1221, 4294901760
    %1223 = vmatprep.subr.mxu0 %v1222
    %v1224 = vand.u32 %v85, 4294901760
    %v1225 = vsub.f32 %v85, %v1224
    %v1226 = vand.u32 %v1225, 4294901760
    %1227 = vmatpush2.msra.mxu0 %v1226
    %v1228 = vand.u32 %v84, 4294901760
    %v1229 = vsub.f32 %v84, %v1228
    %v1230 = vand.u32 %v1229, 4294901760
    %1231 = vmatprep.subr.mxu0 %v1230
    %v1232 = vand.u32 %v83, 4294901760
    %v1233 = vsub.f32 %v83, %v1232
    %v1234 = vand.u32 %v1233, 4294901760
    %1235 = vmatpush2.msra.mxu0 %v1234
    %v1236 = vand.u32 %v82, 4294901760
    %v1237 = vsub.f32 %v82, %v1236
    %v1238 = vand.u32 %v1237, 4294901760
    %1239 = vmatprep.subr.mxu0 %v1238
    %v1240 = vand.u32 %v81, 4294901760
    %v1241 = vsub.f32 %v81, %v1240
    %v1242 = vand.u32 %v1241, 4294901760
    %1243 = vmatpush2.msra.mxu0 %v1242
    %v1244 = vand.u32 %v80, 4294901760
    %v1245 = vsub.f32 %v80, %v1244
    %v1246 = vand.u32 %v1245, 4294901760
    %1247 = vmatprep.subr.mxu0 %v1246
    %v1248 = vand.u32 %v79, 4294901760
    %v1249 = vsub.f32 %v79, %v1248
    %v1250 = vand.u32 %v1249, 4294901760
    %1251 = vmatpush2.msra.mxu0 %v1250
    %v1252 = vand.u32 %v78, 4294901760
    %v1253 = vsub.f32 %v78, %v1252
    %v1254 = vand.u32 %v1253, 4294901760
    %1255 = vmatprep.subr.mxu0 %v1254
    %v1256 = vand.u32 %v77, 4294901760
    %v1257 = vsub.f32 %v77, %v1256
    %v1258 = vand.u32 %v1257, 4294901760
    %1259 = vmatpush2.msra.mxu0 %v1258
    %v1260 = vand.u32 %v119, 4294901760
    %1261 = vmatprep.mubr.f32.mxu0 %v1260
    %v1262 = vand.u32 %v118, 4294901760
    %1263 = vmatmul.mubr.f32.gmra.mxu0 %v1262
    %v1264 = vpop.f32.mrf.mxu0
    %v1265 = vadd.f32 %v1000, %v1264
    %v1266 = vpop.f32.mrf.mxu0
    %v1267 = vadd.f32 %v1002, %v1266
    %1268 = vdwg.mxu0
    %v1269 = vand.u32 %v76, 4294901760
    %1270 = vmatprep.subr.mxu0 %v1269
    %v1271 = vand.u32 %v75, 4294901760
    %1272 = vmatpush1.msra.mxu0 %v1271
    %v1273 = vand.u32 %v74, 4294901760
    %1274 = vmatprep.subr.mxu0 %v1273
    %v1275 = vand.u32 %v73, 4294901760
    %1276 = vmatpush1.msra.mxu0 %v1275
    %v1277 = vand.u32 %v72, 4294901760
    %1278 = vmatprep.subr.mxu0 %v1277
    %v1279 = vand.u32 %v71, 4294901760
    %1280 = vmatpush1.msra.mxu0 %v1279
    %v1281 = vand.u32 %v70, 4294901760
    %1282 = vmatprep.subr.mxu0 %v1281
    %v1283 = vand.u32 %v69, 4294901760
    %1284 = vmatpush1.msra.mxu0 %v1283
    %v1285 = vand.u32 %v68, 4294901760
    %1286 = vmatprep.subr.mxu0 %v1285
    %v1287 = vand.u32 %v67, 4294901760
    %1288 = vmatpush1.msra.mxu0 %v1287
    %v1289 = vand.u32 %v66, 4294901760
    %1290 = vmatprep.subr.mxu0 %v1289
    %v1291 = vand.u32 %v65, 4294901760
    %1292 = vmatpush1.msra.mxu0 %v1291
    %v1293 = vand.u32 %v64, 4294901760
    %1294 = vmatprep.subr.mxu0 %v1293
    %v1295 = vand.u32 %v63, 4294901760
    %1296 = vmatpush1.msra.mxu0 %v1295
    %v1297 = vand.u32 %v62, 4294901760
    %1298 = vmatprep.subr.mxu0 %v1297
    %v1299 = vand.u32 %v61, 4294901760
    %1300 = vmatpush1.msra.mxu0 %v1299
    %v1301 = vand.u32 %v60, 4294901760
    %1302 = vmatprep.subr.mxu0 %v1301
    %v1303 = vand.u32 %v59, 4294901760
    %1304 = vmatpush1.msra.mxu0 %v1303
    %v1305 = vand.u32 %v58, 4294901760
    %1306 = vmatprep.subr.mxu0 %v1305
    %v1307 = vand.u32 %v57, 4294901760
    %1308 = vmatpush1.msra.mxu0 %v1307
    %v1309 = vand.u32 %v56, 4294901760
    %1310 = vmatprep.subr.mxu0 %v1309
    %v1311 = vand.u32 %v55, 4294901760
    %1312 = vmatpush1.msra.mxu0 %v1311
    %v1313 = vand.u32 %v54, 4294901760
    %1314 = vmatprep.subr.mxu0 %v1313
    %v1315 = vand.u32 %v53, 4294901760
    %1316 = vmatpush1.msra.mxu0 %v1315
    %v1317 = vand.u32 %v52, 4294901760
    %1318 = vmatprep.subr.mxu0 %v1317
    %v1319 = vand.u32 %v51, 4294901760
    %1320 = vmatpush1.msra.mxu0 %v1319
    %v1321 = vand.u32 %v50, 4294901760
    %1322 = vmatprep.subr.mxu0 %v1321
    %v1323 = vand.u32 %v49, 4294901760
    %1324 = vmatpush1.msra.mxu0 %v1323
    %v1325 = vand.u32 %v48, 4294901760
    %1326 = vmatprep.subr.mxu0 %v1325
    %v1327 = vand.u32 %v47, 4294901760
    %1328 = vmatpush1.msra.mxu0 %v1327
    %v1329 = vand.u32 %v46, 4294901760
    %1330 = vmatprep.subr.mxu0 %v1329
    %v1331 = vand.u32 %v45, 4294901760
    %1332 = vmatpush1.msra.mxu0 %v1331
    %v1333 = vand.u32 %v108, 4294901760
    %1334 = vmatprep.subr.mxu0 %v1333
    %v1335 = vand.u32 %v107, 4294901760
    %1336 = vmatpush2.msra.mxu0 %v1335
    %v1337 = vand.u32 %v106, 4294901760
    %1338 = vmatprep.subr.mxu0 %v1337
    %v1339 = vand.u32 %v105, 4294901760
    %1340 = vmatpush2.msra.mxu0 %v1339
    %v1341 = vand.u32 %v104, 4294901760
    %1342 = vmatprep.subr.mxu0 %v1341
    %v1343 = vand.u32 %v103, 4294901760
    %1344 = vmatpush2.msra.mxu0 %v1343
    %v1345 = vand.u32 %v102, 4294901760
    %1346 = vmatprep.subr.mxu0 %v1345
    %v1347 = vand.u32 %v101, 4294901760
    %1348 = vmatpush2.msra.mxu0 %v1347
    %v1349 = vand.u32 %v100, 4294901760
    %1350 = vmatprep.subr.mxu0 %v1349
    %v1351 = vand.u32 %v99, 4294901760
    %1352 = vmatpush2.msra.mxu0 %v1351
    %v1353 = vand.u32 %v98, 4294901760
    %1354 = vmatprep.subr.mxu0 %v1353
    %v1355 = vand.u32 %v97, 4294901760
    %1356 = vmatpush2.msra.mxu0 %v1355
    %v1357 = vand.u32 %v96, 4294901760
    %1358 = vmatprep.subr.mxu0 %v1357
    %v1359 = vand.u32 %v95, 4294901760
    %1360 = vmatpush2.msra.mxu0 %v1359
    %v1361 = vand.u32 %v94, 4294901760
    %1362 = vmatprep.subr.mxu0 %v1361
    %v1363 = vand.u32 %v93, 4294901760
    %1364 = vmatpush2.msra.mxu0 %v1363
    %v1365 = vand.u32 %v92, 4294901760
    %1366 = vmatprep.subr.mxu0 %v1365
    %v1367 = vand.u32 %v91, 4294901760
    %1368 = vmatpush2.msra.mxu0 %v1367
    %v1369 = vand.u32 %v90, 4294901760
    %1370 = vmatprep.subr.mxu0 %v1369
    %v1371 = vand.u32 %v89, 4294901760
    %1372 = vmatpush2.msra.mxu0 %v1371
    %v1373 = vand.u32 %v88, 4294901760
    %1374 = vmatprep.subr.mxu0 %v1373
    %v1375 = vand.u32 %v87, 4294901760
    %1376 = vmatpush2.msra.mxu0 %v1375
    %v1377 = vand.u32 %v86, 4294901760
    %1378 = vmatprep.subr.mxu0 %v1377
    %v1379 = vand.u32 %v85, 4294901760
    %1380 = vmatpush2.msra.mxu0 %v1379
    %v1381 = vand.u32 %v84, 4294901760
    %1382 = vmatprep.subr.mxu0 %v1381
    %v1383 = vand.u32 %v83, 4294901760
    %1384 = vmatpush2.msra.mxu0 %v1383
    %v1385 = vand.u32 %v82, 4294901760
    %1386 = vmatprep.subr.mxu0 %v1385
    %v1387 = vand.u32 %v81, 4294901760
    %1388 = vmatpush2.msra.mxu0 %v1387
    %v1389 = vand.u32 %v80, 4294901760
    %1390 = vmatprep.subr.mxu0 %v1389
    %v1391 = vand.u32 %v79, 4294901760
    %1392 = vmatpush2.msra.mxu0 %v1391
    %v1393 = vand.u32 %v78, 4294901760
    %1394 = vmatprep.subr.mxu0 %v1393
    %v1395 = vand.u32 %v77, 4294901760
    %1396 = vmatpush2.msra.mxu0 %v1395
    %v1397 = vand.u32 %v119, 4294901760
    %1398 = vmatprep.mubr.f32.mxu0 %v1397
    %v1399 = vand.u32 %v118, 4294901760
    %1400 = vmatmul.mubr.f32.gmra.mxu0 %v1399
    %v1401 = vpop.f32.mrf.mxu0
    %v1402 = vadd.f32 %v1265, %v1401
    %v1403 = vpop.f32.mrf.mxu0
    %v1404 = vadd.f32 %v1267, %v1403
    %1405 = vdwg.mxu0
    %v1406 = vmul.f32 %v44, %v44
    %v1409 = vunpack.c.l.s4 1983009808
    %v1410 = vunpack.c.0.s8 %v1409
    %v1411 = vlaneseq
    %v1412 = vshrl.u32 %v1411, 7
    %v1413 = vsub.s32 %v1410, %v1412
    %v1414 = vrot.slane %v1406, %v1413
    %v1415 = vcombine.high %v1414, %v1414
    %v1418 = vand.u32 %v76, 4294901760
    %1419 = vmatprep.subr.mxu0 %v1418
    %v1420 = vand.u32 %v75, 4294901760
    %1421 = vmatpush1.msra.mxu0 %v1420
    %v1422 = vand.u32 %v74, 4294901760
    %1423 = vmatprep.subr.mxu0 %v1422
    %v1424 = vand.u32 %v73, 4294901760
    %1425 = vmatpush1.msra.mxu0 %v1424
    %v1426 = vand.u32 %v72, 4294901760
    %1427 = vmatprep.subr.mxu0 %v1426
    %v1428 = vand.u32 %v71, 4294901760
    %1429 = vmatpush1.msra.mxu0 %v1428
    %v1430 = vand.u32 %v70, 4294901760
    %1431 = vmatprep.subr.mxu0 %v1430
    %v1432 = vand.u32 %v69, 4294901760
    %1433 = vmatpush1.msra.mxu0 %v1432
    %v1434 = vand.u32 %v68, 4294901760
    %1435 = vmatprep.subr.mxu0 %v1434
    %v1436 = vand.u32 %v67, 4294901760
    %1437 = vmatpush1.msra.mxu0 %v1436
    %v1438 = vand.u32 %v66, 4294901760
    %1439 = vmatprep.subr.mxu0 %v1438
    %v1440 = vand.u32 %v65, 4294901760
    %1441 = vmatpush1.msra.mxu0 %v1440
    %v1442 = vand.u32 %v64, 4294901760
    %1443 = vmatprep.subr.mxu0 %v1442
    %v1444 = vand.u32 %v63, 4294901760
    %1445 = vmatpush1.msra.mxu0 %v1444
    %v1446 = vand.u32 %v62, 4294901760
    %1447 = vmatprep.subr.mxu0 %v1446
    %v1448 = vand.u32 %v61, 4294901760
    %1449 = vmatpush1.msra.mxu0 %v1448
    %v1450 = vand.u32 %v60, 4294901760
    %1451 = vmatprep.subr.mxu0 %v1450
    %v1452 = vand.u32 %v59, 4294901760
    %1453 = vmatpush1.msra.mxu0 %v1452
    %v1454 = vand.u32 %v58, 4294901760
    %1455 = vmatprep.subr.mxu0 %v1454
    %v1456 = vand.u32 %v57, 4294901760
    %1457 = vmatpush1.msra.mxu0 %v1456
    %v1458 = vand.u32 %v56, 4294901760
    %1459 = vmatprep.subr.mxu0 %v1458
    %v1460 = vand.u32 %v55, 4294901760
    %1461 = vmatpush1.msra.mxu0 %v1460
    %v1462 = vand.u32 %v54, 4294901760
    %1463 = vmatprep.subr.mxu0 %v1462
    %v1464 = vand.u32 %v53, 4294901760
    %1465 = vmatpush1.msra.mxu0 %v1464
    %v1466 = vand.u32 %v52, 4294901760
    %1467 = vmatprep.subr.mxu0 %v1466
    %v1468 = vand.u32 %v51, 4294901760
    %1469 = vmatpush1.msra.mxu0 %v1468
    %v1470 = vand.u32 %v50, 4294901760
    %1471 = vmatprep.subr.mxu0 %v1470
    %v1472 = vand.u32 %v49, 4294901760
    %1473 = vmatpush1.msra.mxu0 %v1472
    %v1474 = vand.u32 %v48, 4294901760
    %1475 = vmatprep.subr.mxu0 %v1474
    %v1476 = vand.u32 %v47, 4294901760
    %1477 = vmatpush1.msra.mxu0 %v1476
    %v1478 = vand.u32 %v46, 4294901760
    %1479 = vmatprep.subr.mxu0 %v1478
    %v1480 = vand.u32 %v45, 4294901760
    %1481 = vmatpush1.msra.mxu0 %v1480
    %v1482 = vand.u32 %v108, 4294901760
    %1483 = vmatprep.subr.mxu0 %v1482
    %v1484 = vand.u32 %v107, 4294901760
    %1485 = vmatpush2.msra.mxu0 %v1484
    %v1486 = vand.u32 %v106, 4294901760
    %1487 = vmatprep.subr.mxu0 %v1486
    %v1488 = vand.u32 %v105, 4294901760
    %1489 = vmatpush2.msra.mxu0 %v1488
    %v1490 = vand.u32 %v104, 4294901760
    %1491 = vmatprep.subr.mxu0 %v1490
    %v1492 = vand.u32 %v103, 4294901760
    %1493 = vmatpush2.msra.mxu0 %v1492
    %v1494 = vand.u32 %v102, 4294901760
    %1495 = vmatprep.subr.mxu0 %v1494
    %v1496 = vand.u32 %v101, 4294901760
    %1497 = vmatpush2.msra.mxu0 %v1496
    %v1498 = vand.u32 %v100, 4294901760
    %1499 = vmatprep.subr.mxu0 %v1498
    %v1500 = vand.u32 %v99, 4294901760
    %1501 = vmatpush2.msra.mxu0 %v1500
    %v1502 = vand.u32 %v98, 4294901760
    %1503 = vmatprep.subr.mxu0 %v1502
    %v1504 = vand.u32 %v97, 4294901760
    %1505 = vmatpush2.msra.mxu0 %v1504
    %v1506 = vand.u32 %v96, 4294901760
    %1507 = vmatprep.subr.mxu0 %v1506
    %v1508 = vand.u32 %v95, 4294901760
    %1509 = vmatpush2.msra.mxu0 %v1508
    %v1510 = vand.u32 %v94, 4294901760
    %1511 = vmatprep.subr.mxu0 %v1510
    %v1512 = vand.u32 %v93, 4294901760
    %1513 = vmatpush2.msra.mxu0 %v1512
    %v1514 = vand.u32 %v92, 4294901760
    %1515 = vmatprep.subr.mxu0 %v1514
    %v1516 = vand.u32 %v91, 4294901760
    %1517 = vmatpush2.msra.mxu0 %v1516
    %v1518 = vand.u32 %v90, 4294901760
    %1519 = vmatprep.subr.mxu0 %v1518
    %v1520 = vand.u32 %v89, 4294901760
    %1521 = vmatpush2.msra.mxu0 %v1520
    %v1522 = vand.u32 %v88, 4294901760
    %1523 = vmatprep.subr.mxu0 %v1522
    %v1524 = vand.u32 %v87, 4294901760
    %1525 = vmatpush2.msra.mxu0 %v1524
    %v1526 = vand.u32 %v86, 4294901760
    %1527 = vmatprep.subr.mxu0 %v1526
    %v1528 = vand.u32 %v85, 4294901760
    %1529 = vmatpush2.msra.mxu0 %v1528
    %v1530 = vand.u32 %v84, 4294901760
    %1531 = vmatprep.subr.mxu0 %v1530
    %v1532 = vand.u32 %v83, 4294901760
    %1533 = vmatpush2.msra.mxu0 %v1532
    %v1534 = vand.u32 %v82, 4294901760
    %1535 = vmatprep.subr.mxu0 %v1534
    %v1536 = vand.u32 %v81, 4294901760
    %1537 = vmatpush2.msra.mxu0 %v1536
    %v1538 = vand.u32 %v80, 4294901760
    %1539 = vmatprep.subr.mxu0 %v1538
    %v1540 = vand.u32 %v79, 4294901760
    %1541 = vmatpush2.msra.mxu0 %v1540
    %v1542 = vand.u32 %v78, 4294901760
    %1543 = vmatprep.subr.mxu0 %v1542
    %v1544 = vand.u32 %v77, 4294901760
    %1545 = vmatpush2.msra.mxu0 %v1544
    %v1546 = vand.u32 %v1415, 4294901760
    %v1547 = vsub.f32 %v1415, %v1546
    %v1548 = vand.u32 %v1547, 4294901760
    %v1549 = vsub.f32 %v1547, %v1548
    %v1550 = vand.u32 %v1549, 4294901760
    %1551 = vmatprep.mubr.f32.mxu0 %v1550
    %v1552 = vand.u32 %v1414, 4294901760
    %v1553 = vsub.f32 %v1414, %v1552
    %v1554 = vand.u32 %v1553, 4294901760
    %v1555 = vsub.f32 %v1553, %v1554
    %v1556 = vand.u32 %v1555, 4294901760
    %1557 = vmatmul.mubr.f32.gmra.mxu0 %v1556
    %v1558 = vpop.f32.mrf.mxu0
    %v1559 = vadd.f32 0.0, %v1558
    %v1560 = vpop.f32.mrf.mxu0
    %v1561 = vadd.f32 0.0, %v1560
    %1562 = vdwg.mxu0
    %v1563 = vand.u32 %v76, 4294901760
    %v1564 = vsub.f32 %v76, %v1563
    %v1565 = vand.u32 %v1564, 4294901760
    %v1566 = vsub.f32 %v1564, %v1565
    %v1567 = vand.u32 %v1566, 4294901760
    %1568 = vmatprep.subr.mxu0 %v1567
    %v1569 = vand.u32 %v75, 4294901760
    %v1570 = vsub.f32 %v75, %v1569
    %v1571 = vand.u32 %v1570, 4294901760
    %v1572 = vsub.f32 %v1570, %v1571
    %v1573 = vand.u32 %v1572, 4294901760
    %1574 = vmatpush1.msra.mxu0 %v1573
    %v1575 = vand.u32 %v74, 4294901760
    %v1576 = vsub.f32 %v74, %v1575
    %v1577 = vand.u32 %v1576, 4294901760
    %v1578 = vsub.f32 %v1576, %v1577
    %v1579 = vand.u32 %v1578, 4294901760
    %1580 = vmatprep.subr.mxu0 %v1579
    %v1581 = vand.u32 %v73, 4294901760
    %v1582 = vsub.f32 %v73, %v1581
    %v1583 = vand.u32 %v1582, 4294901760
    %v1584 = vsub.f32 %v1582, %v1583
    %v1585 = vand.u32 %v1584, 4294901760
    %1586 = vmatpush1.msra.mxu0 %v1585
    %v1587 = vand.u32 %v72, 4294901760
    %v1588 = vsub.f32 %v72, %v1587
    %v1589 = vand.u32 %v1588, 4294901760
    %v1590 = vsub.f32 %v1588, %v1589
    %v1591 = vand.u32 %v1590, 4294901760
    %1592 = vmatprep.subr.mxu0 %v1591
    %v1593 = vand.u32 %v71, 4294901760
    %v1594 = vsub.f32 %v71, %v1593
    %v1595 = vand.u32 %v1594, 4294901760
    %v1596 = vsub.f32 %v1594, %v1595
    %v1597 = vand.u32 %v1596, 4294901760
    %1598 = vmatpush1.msra.mxu0 %v1597
    %v1599 = vand.u32 %v70, 4294901760
    %v1600 = vsub.f32 %v70, %v1599
    %v1601 = vand.u32 %v1600, 4294901760
    %v1602 = vsub.f32 %v1600, %v1601
    %v1603 = vand.u32 %v1602, 4294901760
    %1604 = vmatprep.subr.mxu0 %v1603
    %v1605 = vand.u32 %v69, 4294901760
    %v1606 = vsub.f32 %v69, %v1605
    %v1607 = vand.u32 %v1606, 4294901760
    %v1608 = vsub.f32 %v1606, %v1607
    %v1609 = vand.u32 %v1608, 4294901760
    %1610 = vmatpush1.msra.mxu0 %v1609
    %v1611 = vand.u32 %v68, 4294901760
    %v1612 = vsub.f32 %v68, %v1611
    %v1613 = vand.u32 %v1612, 4294901760
    %v1614 = vsub.f32 %v1612, %v1613
    %v1615 = vand.u32 %v1614, 4294901760
    %1616 = vmatprep.subr.mxu0 %v1615
    %v1617 = vand.u32 %v67, 4294901760
    %v1618 = vsub.f32 %v67, %v1617
    %v1619 = vand.u32 %v1618, 4294901760
    %v1620 = vsub.f32 %v1618, %v1619
    %v1621 = vand.u32 %v1620, 4294901760
    %1622 = vmatpush1.msra.mxu0 %v1621
    %v1623 = vand.u32 %v66, 4294901760
    %v1624 = vsub.f32 %v66, %v1623
    %v1625 = vand.u32 %v1624, 4294901760
    %v1626 = vsub.f32 %v1624, %v1625
    %v1627 = vand.u32 %v1626, 4294901760
    %1628 = vmatprep.subr.mxu0 %v1627
    %v1629 = vand.u32 %v65, 4294901760
    %v1630 = vsub.f32 %v65, %v1629
    %v1631 = vand.u32 %v1630, 4294901760
    %v1632 = vsub.f32 %v1630, %v1631
    %v1633 = vand.u32 %v1632, 4294901760
    %1634 = vmatpush1.msra.mxu0 %v1633
    %v1635 = vand.u32 %v64, 4294901760
    %v1636 = vsub.f32 %v64, %v1635
    %v1637 = vand.u32 %v1636, 4294901760
    %v1638 = vsub.f32 %v1636, %v1637
    %v1639 = vand.u32 %v1638, 4294901760
    %1640 = vmatprep.subr.mxu0 %v1639
    %v1641 = vand.u32 %v63, 4294901760
    %v1642 = vsub.f32 %v63, %v1641
    %v1643 = vand.u32 %v1642, 4294901760
    %v1644 = vsub.f32 %v1642, %v1643
    %v1645 = vand.u32 %v1644, 4294901760
    %1646 = vmatpush1.msra.mxu0 %v1645
    %v1647 = vand.u32 %v62, 4294901760
    %v1648 = vsub.f32 %v62, %v1647
    %v1649 = vand.u32 %v1648, 4294901760
    %v1650 = vsub.f32 %v1648, %v1649
    %v1651 = vand.u32 %v1650, 4294901760
    %1652 = vmatprep.subr.mxu0 %v1651
    %v1653 = vand.u32 %v61, 4294901760
    %v1654 = vsub.f32 %v61, %v1653
    %v1655 = vand.u32 %v1654, 4294901760
    %v1656 = vsub.f32 %v1654, %v1655
    %v1657 = vand.u32 %v1656, 4294901760
    %1658 = vmatpush1.msra.mxu0 %v1657
    %v1659 = vand.u32 %v60, 4294901760
    %v1660 = vsub.f32 %v60, %v1659
    %v1661 = vand.u32 %v1660, 4294901760
    %v1662 = vsub.f32 %v1660, %v1661
    %v1663 = vand.u32 %v1662, 4294901760
    %1664 = vmatprep.subr.mxu0 %v1663
    %v1665 = vand.u32 %v59, 4294901760
    %v1666 = vsub.f32 %v59, %v1665
    %v1667 = vand.u32 %v1666, 4294901760
    %v1668 = vsub.f32 %v1666, %v1667
    %v1669 = vand.u32 %v1668, 4294901760
    %1670 = vmatpush1.msra.mxu0 %v1669
    %v1671 = vand.u32 %v58, 4294901760
    %v1672 = vsub.f32 %v58, %v1671
    %v1673 = vand.u32 %v1672, 4294901760
    %v1674 = vsub.f32 %v1672, %v1673
    %v1675 = vand.u32 %v1674, 4294901760
    %1676 = vmatprep.subr.mxu0 %v1675
    %v1677 = vand.u32 %v57, 4294901760
    %v1678 = vsub.f32 %v57, %v1677
    %v1679 = vand.u32 %v1678, 4294901760
    %v1680 = vsub.f32 %v1678, %v1679
    %v1681 = vand.u32 %v1680, 4294901760
    %1682 = vmatpush1.msra.mxu0 %v1681
    %v1683 = vand.u32 %v56, 4294901760
    %v1684 = vsub.f32 %v56, %v1683
    %v1685 = vand.u32 %v1684, 4294901760
    %v1686 = vsub.f32 %v1684, %v1685
    %v1687 = vand.u32 %v1686, 4294901760
    %1688 = vmatprep.subr.mxu0 %v1687
    %v1689 = vand.u32 %v55, 4294901760
    %v1690 = vsub.f32 %v55, %v1689
    %v1691 = vand.u32 %v1690, 4294901760
    %v1692 = vsub.f32 %v1690, %v1691
    %v1693 = vand.u32 %v1692, 4294901760
    %1694 = vmatpush1.msra.mxu0 %v1693
    %v1695 = vand.u32 %v54, 4294901760
    %v1696 = vsub.f32 %v54, %v1695
    %v1697 = vand.u32 %v1696, 4294901760
    %v1698 = vsub.f32 %v1696, %v1697
    %v1699 = vand.u32 %v1698, 4294901760
    %1700 = vmatprep.subr.mxu0 %v1699
    %v1701 = vand.u32 %v53, 4294901760
    %v1702 = vsub.f32 %v53, %v1701
    %v1703 = vand.u32 %v1702, 4294901760
    %v1704 = vsub.f32 %v1702, %v1703
    %v1705 = vand.u32 %v1704, 4294901760
    %1706 = vmatpush1.msra.mxu0 %v1705
    %v1707 = vand.u32 %v52, 4294901760
    %v1708 = vsub.f32 %v52, %v1707
    %v1709 = vand.u32 %v1708, 4294901760
    %v1710 = vsub.f32 %v1708, %v1709
    %v1711 = vand.u32 %v1710, 4294901760
    %1712 = vmatprep.subr.mxu0 %v1711
    %v1713 = vand.u32 %v51, 4294901760
    %v1714 = vsub.f32 %v51, %v1713
    %v1715 = vand.u32 %v1714, 4294901760
    %v1716 = vsub.f32 %v1714, %v1715
    %v1717 = vand.u32 %v1716, 4294901760
    %1718 = vmatpush1.msra.mxu0 %v1717
    %v1719 = vand.u32 %v50, 4294901760
    %v1720 = vsub.f32 %v50, %v1719
    %v1721 = vand.u32 %v1720, 4294901760
    %v1722 = vsub.f32 %v1720, %v1721
    %v1723 = vand.u32 %v1722, 4294901760
    %1724 = vmatprep.subr.mxu0 %v1723
    %v1725 = vand.u32 %v49, 4294901760
    %v1726 = vsub.f32 %v49, %v1725
    %v1727 = vand.u32 %v1726, 4294901760
    %v1728 = vsub.f32 %v1726, %v1727
    %v1729 = vand.u32 %v1728, 4294901760
    %1730 = vmatpush1.msra.mxu0 %v1729
    %v1731 = vand.u32 %v48, 4294901760
    %v1732 = vsub.f32 %v48, %v1731
    %v1733 = vand.u32 %v1732, 4294901760
    %v1734 = vsub.f32 %v1732, %v1733
    %v1735 = vand.u32 %v1734, 4294901760
    %1736 = vmatprep.subr.mxu0 %v1735
    %v1737 = vand.u32 %v47, 4294901760
    %v1738 = vsub.f32 %v47, %v1737
    %v1739 = vand.u32 %v1738, 4294901760
    %v1740 = vsub.f32 %v1738, %v1739
    %v1741 = vand.u32 %v1740, 4294901760
    %1742 = vmatpush1.msra.mxu0 %v1741
    %v1743 = vand.u32 %v46, 4294901760
    %v1744 = vsub.f32 %v46, %v1743
    %v1745 = vand.u32 %v1744, 4294901760
    %v1746 = vsub.f32 %v1744, %v1745
    %v1747 = vand.u32 %v1746, 4294901760
    %1748 = vmatprep.subr.mxu0 %v1747
    %v1749 = vand.u32 %v45, 4294901760
    %v1750 = vsub.f32 %v45, %v1749
    %v1751 = vand.u32 %v1750, 4294901760
    %v1752 = vsub.f32 %v1750, %v1751
    %v1753 = vand.u32 %v1752, 4294901760
    %1754 = vmatpush1.msra.mxu0 %v1753
    %v1755 = vand.u32 %v108, 4294901760
    %v1756 = vsub.f32 %v108, %v1755
    %v1757 = vand.u32 %v1756, 4294901760
    %v1758 = vsub.f32 %v1756, %v1757
    %v1759 = vand.u32 %v1758, 4294901760
    %1760 = vmatprep.subr.mxu0 %v1759
    %v1761 = vand.u32 %v107, 4294901760
    %v1762 = vsub.f32 %v107, %v1761
    %v1763 = vand.u32 %v1762, 4294901760
    %v1764 = vsub.f32 %v1762, %v1763
    %v1765 = vand.u32 %v1764, 4294901760
    %1766 = vmatpush2.msra.mxu0 %v1765
    %v1767 = vand.u32 %v106, 4294901760
    %v1768 = vsub.f32 %v106, %v1767
    %v1769 = vand.u32 %v1768, 4294901760
    %v1770 = vsub.f32 %v1768, %v1769
    %v1771 = vand.u32 %v1770, 4294901760
    %1772 = vmatprep.subr.mxu0 %v1771
    %v1773 = vand.u32 %v105, 4294901760
    %v1774 = vsub.f32 %v105, %v1773
    %v1775 = vand.u32 %v1774, 4294901760
    %v1776 = vsub.f32 %v1774, %v1775
    %v1777 = vand.u32 %v1776, 4294901760
    %1778 = vmatpush2.msra.mxu0 %v1777
    %v1779 = vand.u32 %v104, 4294901760
    %v1780 = vsub.f32 %v104, %v1779
    %v1781 = vand.u32 %v1780, 4294901760
    %v1782 = vsub.f32 %v1780, %v1781
    %v1783 = vand.u32 %v1782, 4294901760
    %1784 = vmatprep.subr.mxu0 %v1783
    %v1785 = vand.u32 %v103, 4294901760
    %v1786 = vsub.f32 %v103, %v1785
    %v1787 = vand.u32 %v1786, 4294901760
    %v1788 = vsub.f32 %v1786, %v1787
    %v1789 = vand.u32 %v1788, 4294901760
    %1790 = vmatpush2.msra.mxu0 %v1789
    %v1791 = vand.u32 %v102, 4294901760
    %v1792 = vsub.f32 %v102, %v1791
    %v1793 = vand.u32 %v1792, 4294901760
    %v1794 = vsub.f32 %v1792, %v1793
    %v1795 = vand.u32 %v1794, 4294901760
    %1796 = vmatprep.subr.mxu0 %v1795
    %v1797 = vand.u32 %v101, 4294901760
    %v1798 = vsub.f32 %v101, %v1797
    %v1799 = vand.u32 %v1798, 4294901760
    %v1800 = vsub.f32 %v1798, %v1799
    %v1801 = vand.u32 %v1800, 4294901760
    %1802 = vmatpush2.msra.mxu0 %v1801
    %v1803 = vand.u32 %v100, 4294901760
    %v1804 = vsub.f32 %v100, %v1803
    %v1805 = vand.u32 %v1804, 4294901760
    %v1806 = vsub.f32 %v1804, %v1805
    %v1807 = vand.u32 %v1806, 4294901760
    %1808 = vmatprep.subr.mxu0 %v1807
    %v1809 = vand.u32 %v99, 4294901760
    %v1810 = vsub.f32 %v99, %v1809
    %v1811 = vand.u32 %v1810, 4294901760
    %v1812 = vsub.f32 %v1810, %v1811
    %v1813 = vand.u32 %v1812, 4294901760
    %1814 = vmatpush2.msra.mxu0 %v1813
    %v1815 = vand.u32 %v98, 4294901760
    %v1816 = vsub.f32 %v98, %v1815
    %v1817 = vand.u32 %v1816, 4294901760
    %v1818 = vsub.f32 %v1816, %v1817
    %v1819 = vand.u32 %v1818, 4294901760
    %1820 = vmatprep.subr.mxu0 %v1819
    %v1821 = vand.u32 %v97, 4294901760
    %v1822 = vsub.f32 %v97, %v1821
    %v1823 = vand.u32 %v1822, 4294901760
    %v1824 = vsub.f32 %v1822, %v1823
    %v1825 = vand.u32 %v1824, 4294901760
    %1826 = vmatpush2.msra.mxu0 %v1825
    %v1827 = vand.u32 %v96, 4294901760
    %v1828 = vsub.f32 %v96, %v1827
    %v1829 = vand.u32 %v1828, 4294901760
    %v1830 = vsub.f32 %v1828, %v1829
    %v1831 = vand.u32 %v1830, 4294901760
    %1832 = vmatprep.subr.mxu0 %v1831
    %v1833 = vand.u32 %v95, 4294901760
    %v1834 = vsub.f32 %v95, %v1833
    %v1835 = vand.u32 %v1834, 4294901760
    %v1836 = vsub.f32 %v1834, %v1835
    %v1837 = vand.u32 %v1836, 4294901760
    %1838 = vmatpush2.msra.mxu0 %v1837
    %v1839 = vand.u32 %v94, 4294901760
    %v1840 = vsub.f32 %v94, %v1839
    %v1841 = vand.u32 %v1840, 4294901760
    %v1842 = vsub.f32 %v1840, %v1841
    %v1843 = vand.u32 %v1842, 4294901760
    %1844 = vmatprep.subr.mxu0 %v1843
    %v1845 = vand.u32 %v93, 4294901760
    %v1846 = vsub.f32 %v93, %v1845
    %v1847 = vand.u32 %v1846, 4294901760
    %v1848 = vsub.f32 %v1846, %v1847
    %v1849 = vand.u32 %v1848, 4294901760
    %1850 = vmatpush2.msra.mxu0 %v1849
    %v1851 = vand.u32 %v92, 4294901760
    %v1852 = vsub.f32 %v92, %v1851
    %v1853 = vand.u32 %v1852, 4294901760
    %v1854 = vsub.f32 %v1852, %v1853
    %v1855 = vand.u32 %v1854, 4294901760
    %1856 = vmatprep.subr.mxu0 %v1855
    %v1857 = vand.u32 %v91, 4294901760
    %v1858 = vsub.f32 %v91, %v1857
    %v1859 = vand.u32 %v1858, 4294901760
    %v1860 = vsub.f32 %v1858, %v1859
    %v1861 = vand.u32 %v1860, 4294901760
    %1862 = vmatpush2.msra.mxu0 %v1861
    %v1863 = vand.u32 %v90, 4294901760
    %v1864 = vsub.f32 %v90, %v1863
    %v1865 = vand.u32 %v1864, 4294901760
    %v1866 = vsub.f32 %v1864, %v1865
    %v1867 = vand.u32 %v1866, 4294901760
    %1868 = vmatprep.subr.mxu0 %v1867
    %v1869 = vand.u32 %v89, 4294901760
    %v1870 = vsub.f32 %v89, %v1869
    %v1871 = vand.u32 %v1870, 4294901760
    %v1872 = vsub.f32 %v1870, %v1871
    %v1873 = vand.u32 %v1872, 4294901760
    %1874 = vmatpush2.msra.mxu0 %v1873
    %v1875 = vand.u32 %v88, 4294901760
    %v1876 = vsub.f32 %v88, %v1875
    %v1877 = vand.u32 %v1876, 4294901760
    %v1878 = vsub.f32 %v1876, %v1877
    %v1879 = vand.u32 %v1878, 4294901760
    %1880 = vmatprep.subr.mxu0 %v1879
    %v1881 = vand.u32 %v87, 4294901760
    %v1882 = vsub.f32 %v87, %v1881
    %v1883 = vand.u32 %v1882, 4294901760
    %v1884 = vsub.f32 %v1882, %v1883
    %v1885 = vand.u32 %v1884, 4294901760
    %1886 = vmatpush2.msra.mxu0 %v1885
    %v1887 = vand.u32 %v86, 4294901760
    %v1888 = vsub.f32 %v86, %v1887
    %v1889 = vand.u32 %v1888, 4294901760
    %v1890 = vsub.f32 %v1888, %v1889
    %v1891 = vand.u32 %v1890, 4294901760
    %1892 = vmatprep.subr.mxu0 %v1891
    %v1893 = vand.u32 %v85, 4294901760
    %v1894 = vsub.f32 %v85, %v1893
    %v1895 = vand.u32 %v1894, 4294901760
    %v1896 = vsub.f32 %v1894, %v1895
    %v1897 = vand.u32 %v1896, 4294901760
    %1898 = vmatpush2.msra.mxu0 %v1897
    %v1899 = vand.u32 %v84, 4294901760
    %v1900 = vsub.f32 %v84, %v1899
    %v1901 = vand.u32 %v1900, 4294901760
    %v1902 = vsub.f32 %v1900, %v1901
    %v1903 = vand.u32 %v1902, 4294901760
    %1904 = vmatprep.subr.mxu0 %v1903
    %v1905 = vand.u32 %v83, 4294901760
    %v1906 = vsub.f32 %v83, %v1905
    %v1907 = vand.u32 %v1906, 4294901760
    %v1908 = vsub.f32 %v1906, %v1907
    %v1909 = vand.u32 %v1908, 4294901760
    %1910 = vmatpush2.msra.mxu0 %v1909
    %v1911 = vand.u32 %v82, 4294901760
    %v1912 = vsub.f32 %v82, %v1911
    %v1913 = vand.u32 %v1912, 4294901760
    %v1914 = vsub.f32 %v1912, %v1913
    %v1915 = vand.u32 %v1914, 4294901760
    %1916 = vmatprep.subr.mxu0 %v1915
    %v1917 = vand.u32 %v81, 4294901760
    %v1918 = vsub.f32 %v81, %v1917
    %v1919 = vand.u32 %v1918, 4294901760
    %v1920 = vsub.f32 %v1918, %v1919
    %v1921 = vand.u32 %v1920, 4294901760
    %1922 = vmatpush2.msra.mxu0 %v1921
    %v1923 = vand.u32 %v80, 4294901760
    %v1924 = vsub.f32 %v80, %v1923
    %v1925 = vand.u32 %v1924, 4294901760
    %v1926 = vsub.f32 %v1924, %v1925
    %v1927 = vand.u32 %v1926, 4294901760
    %1928 = vmatprep.subr.mxu0 %v1927
    %v1929 = vand.u32 %v79, 4294901760
    %v1930 = vsub.f32 %v79, %v1929
    %v1931 = vand.u32 %v1930, 4294901760
    %v1932 = vsub.f32 %v1930, %v1931
    %v1933 = vand.u32 %v1932, 4294901760
    %1934 = vmatpush2.msra.mxu0 %v1933
    %v1935 = vand.u32 %v78, 4294901760
    %v1936 = vsub.f32 %v78, %v1935
    %v1937 = vand.u32 %v1936, 4294901760
    %v1938 = vsub.f32 %v1936, %v1937
    %v1939 = vand.u32 %v1938, 4294901760
    %1940 = vmatprep.subr.mxu0 %v1939
    %v1941 = vand.u32 %v77, 4294901760
    %v1942 = vsub.f32 %v77, %v1941
    %v1943 = vand.u32 %v1942, 4294901760
    %v1944 = vsub.f32 %v1942, %v1943
    %v1945 = vand.u32 %v1944, 4294901760
    %1946 = vmatpush2.msra.mxu0 %v1945
    %v1947 = vand.u32 %v1415, 4294901760
    %1948 = vmatprep.mubr.f32.mxu0 %v1947
    %v1949 = vand.u32 %v1414, 4294901760
    %1950 = vmatmul.mubr.f32.gmra.mxu0 %v1949
    %v1951 = vpop.f32.mrf.mxu0
    %v1952 = vadd.f32 %v1559, %v1951
    %v1953 = vpop.f32.mrf.mxu0
    %v1954 = vadd.f32 %v1561, %v1953
    %1955 = vdwg.mxu0
    %v1956 = vand.u32 %v76, 4294901760
    %v1957 = vsub.f32 %v76, %v1956
    %1958 = vmatprep.subr.mxu0 %v1957
    %v1959 = vand.u32 %v75, 4294901760
    %v1960 = vsub.f32 %v75, %v1959
    %1961 = vmatpush1.msra.mxu0 %v1960
    %v1962 = vand.u32 %v74, 4294901760
    %v1963 = vsub.f32 %v74, %v1962
    %1964 = vmatprep.subr.mxu0 %v1963
    %v1965 = vand.u32 %v73, 4294901760
    %v1966 = vsub.f32 %v73, %v1965
    %1967 = vmatpush1.msra.mxu0 %v1966
    %v1968 = vand.u32 %v72, 4294901760
    %v1969 = vsub.f32 %v72, %v1968
    %1970 = vmatprep.subr.mxu0 %v1969
    %v1971 = vand.u32 %v71, 4294901760
    %v1972 = vsub.f32 %v71, %v1971
    %1973 = vmatpush1.msra.mxu0 %v1972
    %v1974 = vand.u32 %v70, 4294901760
    %v1975 = vsub.f32 %v70, %v1974
    %1976 = vmatprep.subr.mxu0 %v1975
    %v1977 = vand.u32 %v69, 4294901760
    %v1978 = vsub.f32 %v69, %v1977
    %1979 = vmatpush1.msra.mxu0 %v1978
    %v1980 = vand.u32 %v68, 4294901760
    %v1981 = vsub.f32 %v68, %v1980
    %1982 = vmatprep.subr.mxu0 %v1981
    %v1983 = vand.u32 %v67, 4294901760
    %v1984 = vsub.f32 %v67, %v1983
    %1985 = vmatpush1.msra.mxu0 %v1984
    %v1986 = vand.u32 %v66, 4294901760
    %v1987 = vsub.f32 %v66, %v1986
    %1988 = vmatprep.subr.mxu0 %v1987
    %v1989 = vand.u32 %v65, 4294901760
    %v1990 = vsub.f32 %v65, %v1989
    %1991 = vmatpush1.msra.mxu0 %v1990
    %v1992 = vand.u32 %v64, 4294901760
    %v1993 = vsub.f32 %v64, %v1992
    %1994 = vmatprep.subr.mxu0 %v1993
    %v1995 = vand.u32 %v63, 4294901760
    %v1996 = vsub.f32 %v63, %v1995
    %1997 = vmatpush1.msra.mxu0 %v1996
    %v1998 = vand.u32 %v62, 4294901760
    %v1999 = vsub.f32 %v62, %v1998
    %2000 = vmatprep.subr.mxu0 %v1999
    %v2001 = vand.u32 %v61, 4294901760
    %v2002 = vsub.f32 %v61, %v2001
    %2003 = vmatpush1.msra.mxu0 %v2002
    %v2004 = vand.u32 %v60, 4294901760
    %v2005 = vsub.f32 %v60, %v2004
    %2006 = vmatprep.subr.mxu0 %v2005
    %v2007 = vand.u32 %v59, 4294901760
    %v2008 = vsub.f32 %v59, %v2007
    %2009 = vmatpush1.msra.mxu0 %v2008
    %v2010 = vand.u32 %v58, 4294901760
    %v2011 = vsub.f32 %v58, %v2010
    %2012 = vmatprep.subr.mxu0 %v2011
    %v2013 = vand.u32 %v57, 4294901760
    %v2014 = vsub.f32 %v57, %v2013
    %2015 = vmatpush1.msra.mxu0 %v2014
    %v2016 = vand.u32 %v56, 4294901760
    %v2017 = vsub.f32 %v56, %v2016
    %2018 = vmatprep.subr.mxu0 %v2017
    %v2019 = vand.u32 %v55, 4294901760
    %v2020 = vsub.f32 %v55, %v2019
    %2021 = vmatpush1.msra.mxu0 %v2020
    %v2022 = vand.u32 %v54, 4294901760
    %v2023 = vsub.f32 %v54, %v2022
    %2024 = vmatprep.subr.mxu0 %v2023
    %v2025 = vand.u32 %v53, 4294901760
    %v2026 = vsub.f32 %v53, %v2025
    %2027 = vmatpush1.msra.mxu0 %v2026
    %v2028 = vand.u32 %v52, 4294901760
    %v2029 = vsub.f32 %v52, %v2028
    %2030 = vmatprep.subr.mxu0 %v2029
    %v2031 = vand.u32 %v51, 4294901760
    %v2032 = vsub.f32 %v51, %v2031
    %2033 = vmatpush1.msra.mxu0 %v2032
    %v2034 = vand.u32 %v50, 4294901760
    %v2035 = vsub.f32 %v50, %v2034
    %2036 = vmatprep.subr.mxu0 %v2035
    %v2037 = vand.u32 %v49, 4294901760
    %v2038 = vsub.f32 %v49, %v2037
    %2039 = vmatpush1.msra.mxu0 %v2038
    %v2040 = vand.u32 %v48, 4294901760
    %v2041 = vsub.f32 %v48, %v2040
    %2042 = vmatprep.subr.mxu0 %v2041
    %v2043 = vand.u32 %v47, 4294901760
    %v2044 = vsub.f32 %v47, %v2043
    %2045 = vmatpush1.msra.mxu0 %v2044
    %v2046 = vand.u32 %v46, 4294901760
    %v2047 = vsub.f32 %v46, %v2046
    %2048 = vmatprep.subr.mxu0 %v2047
    %v2049 = vand.u32 %v45, 4294901760
    %v2050 = vsub.f32 %v45, %v2049
    %2051 = vmatpush1.msra.mxu0 %v2050
    %v2052 = vand.u32 %v108, 4294901760
    %v2053 = vsub.f32 %v108, %v2052
    %2054 = vmatprep.subr.mxu0 %v2053
    %v2055 = vand.u32 %v107, 4294901760
    %v2056 = vsub.f32 %v107, %v2055
    %2057 = vmatpush2.msra.mxu0 %v2056
    %v2058 = vand.u32 %v106, 4294901760
    %v2059 = vsub.f32 %v106, %v2058
    %2060 = vmatprep.subr.mxu0 %v2059
    %v2061 = vand.u32 %v105, 4294901760
    %v2062 = vsub.f32 %v105, %v2061
    %2063 = vmatpush2.msra.mxu0 %v2062
    %v2064 = vand.u32 %v104, 4294901760
    %v2065 = vsub.f32 %v104, %v2064
    %2066 = vmatprep.subr.mxu0 %v2065
    %v2067 = vand.u32 %v103, 4294901760
    %v2068 = vsub.f32 %v103, %v2067
    %2069 = vmatpush2.msra.mxu0 %v2068
    %v2070 = vand.u32 %v102, 4294901760
    %v2071 = vsub.f32 %v102, %v2070
    %2072 = vmatprep.subr.mxu0 %v2071
    %v2073 = vand.u32 %v101, 4294901760
    %v2074 = vsub.f32 %v101, %v2073
    %2075 = vmatpush2.msra.mxu0 %v2074
    %v2076 = vand.u32 %v100, 4294901760
    %v2077 = vsub.f32 %v100, %v2076
    %2078 = vmatprep.subr.mxu0 %v2077
    %v2079 = vand.u32 %v99, 4294901760
    %v2080 = vsub.f32 %v99, %v2079
    %2081 = vmatpush2.msra.mxu0 %v2080
    %v2082 = vand.u32 %v98, 4294901760
    %v2083 = vsub.f32 %v98, %v2082
    %2084 = vmatprep.subr.mxu0 %v2083
    %v2085 = vand.u32 %v97, 4294901760
    %v2086 = vsub.f32 %v97, %v2085
    %2087 = vmatpush2.msra.mxu0 %v2086
    %v2088 = vand.u32 %v96, 4294901760
    %v2089 = vsub.f32 %v96, %v2088
    %2090 = vmatprep.subr.mxu0 %v2089
    %v2091 = vand.u32 %v95, 4294901760
    %v2092 = vsub.f32 %v95, %v2091
    %2093 = vmatpush2.msra.mxu0 %v2092
    %v2094 = vand.u32 %v94, 4294901760
    %v2095 = vsub.f32 %v94, %v2094
    %2096 = vmatprep.subr.mxu0 %v2095
    %v2097 = vand.u32 %v93, 4294901760
    %v2098 = vsub.f32 %v93, %v2097
    %2099 = vmatpush2.msra.mxu0 %v2098
    %v2100 = vand.u32 %v92, 4294901760
    %v2101 = vsub.f32 %v92, %v2100
    %2102 = vmatprep.subr.mxu0 %v2101
    %v2103 = vand.u32 %v91, 4294901760
    %v2104 = vsub.f32 %v91, %v2103
    %2105 = vmatpush2.msra.mxu0 %v2104
    %v2106 = vand.u32 %v90, 4294901760
    %v2107 = vsub.f32 %v90, %v2106
    %2108 = vmatprep.subr.mxu0 %v2107
    %v2109 = vand.u32 %v89, 4294901760
    %v2110 = vsub.f32 %v89, %v2109
    %2111 = vmatpush2.msra.mxu0 %v2110
    %v2112 = vand.u32 %v88, 4294901760
    %v2113 = vsub.f32 %v88, %v2112
    %2114 = vmatprep.subr.mxu0 %v2113
    %v2115 = vand.u32 %v87, 4294901760
    %v2116 = vsub.f32 %v87, %v2115
    %2117 = vmatpush2.msra.mxu0 %v2116
    %v2118 = vand.u32 %v86, 4294901760
    %v2119 = vsub.f32 %v86, %v2118
    %2120 = vmatprep.subr.mxu0 %v2119
    %v2121 = vand.u32 %v85, 4294901760
    %v2122 = vsub.f32 %v85, %v2121
    %2123 = vmatpush2.msra.mxu0 %v2122
    %v2124 = vand.u32 %v84, 4294901760
    %v2125 = vsub.f32 %v84, %v2124
    %2126 = vmatprep.subr.mxu0 %v2125
    %v2127 = vand.u32 %v83, 4294901760
    %v2128 = vsub.f32 %v83, %v2127
    %2129 = vmatpush2.msra.mxu0 %v2128
    %v2130 = vand.u32 %v82, 4294901760
    %v2131 = vsub.f32 %v82, %v2130
    %2132 = vmatprep.subr.mxu0 %v2131
    %v2133 = vand.u32 %v81, 4294901760
    %v2134 = vsub.f32 %v81, %v2133
    %2135 = vmatpush2.msra.mxu0 %v2134
    %v2136 = vand.u32 %v80, 4294901760
    %v2137 = vsub.f32 %v80, %v2136
    %2138 = vmatprep.subr.mxu0 %v2137
    %v2139 = vand.u32 %v79, 4294901760
    %v2140 = vsub.f32 %v79, %v2139
    %2141 = vmatpush2.msra.mxu0 %v2140
    %v2142 = vand.u32 %v78, 4294901760
    %v2143 = vsub.f32 %v78, %v2142
    %2144 = vmatprep.subr.mxu0 %v2143
    %v2145 = vand.u32 %v77, 4294901760
    %v2146 = vsub.f32 %v77, %v2145
    %2147 = vmatpush2.msra.mxu0 %v2146
    %v2148 = vand.u32 %v1415, 4294901760
    %v2149 = vsub.f32 %v1415, %v2148
    %2150 = vmatprep.mubr.f32.mxu0 %v2149
    %v2151 = vand.u32 %v1414, 4294901760
    %v2152 = vsub.f32 %v1414, %v2151
    %2153 = vmatmul.mubr.f32.gmra.mxu0 %v2152
    %v2154 = vpop.f32.mrf.mxu0
    %v2155 = vadd.f32 %v1952, %v2154
    %v2156 = vpop.f32.mrf.mxu0
    %v2157 = vadd.f32 %v1954, %v2156
    %2158 = vdwg.mxu0
    %v2159 = vand.u32 %v76, 4294901760
    %2160 = vmatprep.subr.mxu0 %v2159
    %v2161 = vand.u32 %v75, 4294901760
    %2162 = vmatpush1.msra.mxu0 %v2161
    %v2163 = vand.u32 %v74, 4294901760
    %2164 = vmatprep.subr.mxu0 %v2163
    %v2165 = vand.u32 %v73, 4294901760
    %2166 = vmatpush1.msra.mxu0 %v2165
    %v2167 = vand.u32 %v72, 4294901760
    %2168 = vmatprep.subr.mxu0 %v2167
    %v2169 = vand.u32 %v71, 4294901760
    %2170 = vmatpush1.msra.mxu0 %v2169
    %v2171 = vand.u32 %v70, 4294901760
    %2172 = vmatprep.subr.mxu0 %v2171
    %v2173 = vand.u32 %v69, 4294901760
    %2174 = vmatpush1.msra.mxu0 %v2173
    %v2175 = vand.u32 %v68, 4294901760
    %2176 = vmatprep.subr.mxu0 %v2175
    %v2177 = vand.u32 %v67, 4294901760
    %2178 = vmatpush1.msra.mxu0 %v2177
    %v2179 = vand.u32 %v66, 4294901760
    %2180 = vmatprep.subr.mxu0 %v2179
    %v2181 = vand.u32 %v65, 4294901760
    %2182 = vmatpush1.msra.mxu0 %v2181
    %v2183 = vand.u32 %v64, 4294901760
    %2184 = vmatprep.subr.mxu0 %v2183
    %v2185 = vand.u32 %v63, 4294901760
    %2186 = vmatpush1.msra.mxu0 %v2185
    %v2187 = vand.u32 %v62, 4294901760
    %2188 = vmatprep.subr.mxu0 %v2187
    %v2189 = vand.u32 %v61, 4294901760
    %2190 = vmatpush1.msra.mxu0 %v2189
    %v2191 = vand.u32 %v60, 4294901760
    %2192 = vmatprep.subr.mxu0 %v2191
    %v2193 = vand.u32 %v59, 4294901760
    %2194 = vmatpush1.msra.mxu0 %v2193
    %v2195 = vand.u32 %v58, 4294901760
    %2196 = vmatprep.subr.mxu0 %v2195
    %v2197 = vand.u32 %v57, 4294901760
    %2198 = vmatpush1.msra.mxu0 %v2197
    %v2199 = vand.u32 %v56, 4294901760
    %2200 = vmatprep.subr.mxu0 %v2199
    %v2201 = vand.u32 %v55, 4294901760
    %2202 = vmatpush1.msra.mxu0 %v2201
    %v2203 = vand.u32 %v54, 4294901760
    %2204 = vmatprep.subr.mxu0 %v2203
    %v2205 = vand.u32 %v53, 4294901760
    %2206 = vmatpush1.msra.mxu0 %v2205
    %v2207 = vand.u32 %v52, 4294901760
    %2208 = vmatprep.subr.mxu0 %v2207
    %v2209 = vand.u32 %v51, 4294901760
    %2210 = vmatpush1.msra.mxu0 %v2209
    %v2211 = vand.u32 %v50, 4294901760
    %2212 = vmatprep.subr.mxu0 %v2211
    %v2213 = vand.u32 %v49, 4294901760
    %2214 = vmatpush1.msra.mxu0 %v2213
    %v2215 = vand.u32 %v48, 4294901760
    %2216 = vmatprep.subr.mxu0 %v2215
    %v2217 = vand.u32 %v47, 4294901760
    %2218 = vmatpush1.msra.mxu0 %v2217
    %v2219 = vand.u32 %v46, 4294901760
    %2220 = vmatprep.subr.mxu0 %v2219
    %v2221 = vand.u32 %v45, 4294901760
    %2222 = vmatpush1.msra.mxu0 %v2221
    %v2223 = vand.u32 %v108, 4294901760
    %2224 = vmatprep.subr.mxu0 %v2223
    %v2225 = vand.u32 %v107, 4294901760
    %2226 = vmatpush2.msra.mxu0 %v2225
    %v2227 = vand.u32 %v106, 4294901760
    %2228 = vmatprep.subr.mxu0 %v2227
    %v2229 = vand.u32 %v105, 4294901760
    %2230 = vmatpush2.msra.mxu0 %v2229
    %v2231 = vand.u32 %v104, 4294901760
    %2232 = vmatprep.subr.mxu0 %v2231
    %v2233 = vand.u32 %v103, 4294901760
    %2234 = vmatpush2.msra.mxu0 %v2233
    %v2235 = vand.u32 %v102, 4294901760
    %2236 = vmatprep.subr.mxu0 %v2235
    %v2237 = vand.u32 %v101, 4294901760
    %2238 = vmatpush2.msra.mxu0 %v2237
    %v2239 = vand.u32 %v100, 4294901760
    %2240 = vmatprep.subr.mxu0 %v2239
    %v2241 = vand.u32 %v99, 4294901760
    %2242 = vmatpush2.msra.mxu0 %v2241
    %v2243 = vand.u32 %v98, 4294901760
    %2244 = vmatprep.subr.mxu0 %v2243
    %v2245 = vand.u32 %v97, 4294901760
    %2246 = vmatpush2.msra.mxu0 %v2245
    %v2247 = vand.u32 %v96, 4294901760
    %2248 = vmatprep.subr.mxu0 %v2247
    %v2249 = vand.u32 %v95, 4294901760
    %2250 = vmatpush2.msra.mxu0 %v2249
    %v2251 = vand.u32 %v94, 4294901760
    %2252 = vmatprep.subr.mxu0 %v2251
    %v2253 = vand.u32 %v93, 4294901760
    %2254 = vmatpush2.msra.mxu0 %v2253
    %v2255 = vand.u32 %v92, 4294901760
    %2256 = vmatprep.subr.mxu0 %v2255
    %v2257 = vand.u32 %v91, 4294901760
    %2258 = vmatpush2.msra.mxu0 %v2257
    %v2259 = vand.u32 %v90, 4294901760
    %2260 = vmatprep.subr.mxu0 %v2259
    %v2261 = vand.u32 %v89, 4294901760
    %2262 = vmatpush2.msra.mxu0 %v2261
    %v2263 = vand.u32 %v88, 4294901760
    %2264 = vmatprep.subr.mxu0 %v2263
    %v2265 = vand.u32 %v87, 4294901760
    %2266 = vmatpush2.msra.mxu0 %v2265
    %v2267 = vand.u32 %v86, 4294901760
    %2268 = vmatprep.subr.mxu0 %v2267
    %v2269 = vand.u32 %v85, 4294901760
    %2270 = vmatpush2.msra.mxu0 %v2269
    %v2271 = vand.u32 %v84, 4294901760
    %2272 = vmatprep.subr.mxu0 %v2271
    %v2273 = vand.u32 %v83, 4294901760
    %2274 = vmatpush2.msra.mxu0 %v2273
    %v2275 = vand.u32 %v82, 4294901760
    %2276 = vmatprep.subr.mxu0 %v2275
    %v2277 = vand.u32 %v81, 4294901760
    %2278 = vmatpush2.msra.mxu0 %v2277
    %v2279 = vand.u32 %v80, 4294901760
    %2280 = vmatprep.subr.mxu0 %v2279
    %v2281 = vand.u32 %v79, 4294901760
    %2282 = vmatpush2.msra.mxu0 %v2281
    %v2283 = vand.u32 %v78, 4294901760
    %2284 = vmatprep.subr.mxu0 %v2283
    %v2285 = vand.u32 %v77, 4294901760
    %2286 = vmatpush2.msra.mxu0 %v2285
    %v2287 = vand.u32 %v1415, 4294901760
    %v2288 = vsub.f32 %v1415, %v2287
    %v2289 = vand.u32 %v2288, 4294901760
    %2290 = vmatprep.mubr.f32.mxu0 %v2289
    %v2291 = vand.u32 %v1414, 4294901760
    %v2292 = vsub.f32 %v1414, %v2291
    %v2293 = vand.u32 %v2292, 4294901760
    %2294 = vmatmul.mubr.f32.gmra.mxu0 %v2293
    %v2295 = vpop.f32.mrf.mxu0
    %v2296 = vadd.f32 %v2155, %v2295
    %v2297 = vpop.f32.mrf.mxu0
    %v2298 = vadd.f32 %v2157, %v2297
    %2299 = vdwg.mxu0
    %v2300 = vand.u32 %v76, 4294901760
    %v2301 = vsub.f32 %v76, %v2300
    %v2302 = vand.u32 %v2301, 4294901760
    %2303 = vmatprep.subr.mxu0 %v2302
    %v2304 = vand.u32 %v75, 4294901760
    %v2305 = vsub.f32 %v75, %v2304
    %v2306 = vand.u32 %v2305, 4294901760
    %2307 = vmatpush1.msra.mxu0 %v2306
    %v2308 = vand.u32 %v74, 4294901760
    %v2309 = vsub.f32 %v74, %v2308
    %v2310 = vand.u32 %v2309, 4294901760
    %2311 = vmatprep.subr.mxu0 %v2310
    %v2312 = vand.u32 %v73, 4294901760
    %v2313 = vsub.f32 %v73, %v2312
    %v2314 = vand.u32 %v2313, 4294901760
    %2315 = vmatpush1.msra.mxu0 %v2314
    %v2316 = vand.u32 %v72, 4294901760
    %v2317 = vsub.f32 %v72, %v2316
    %v2318 = vand.u32 %v2317, 4294901760
    %2319 = vmatprep.subr.mxu0 %v2318
    %v2320 = vand.u32 %v71, 4294901760
    %v2321 = vsub.f32 %v71, %v2320
    %v2322 = vand.u32 %v2321, 4294901760
    %2323 = vmatpush1.msra.mxu0 %v2322
    %v2324 = vand.u32 %v70, 4294901760
    %v2325 = vsub.f32 %v70, %v2324
    %v2326 = vand.u32 %v2325, 4294901760
    %2327 = vmatprep.subr.mxu0 %v2326
    %v2328 = vand.u32 %v69, 4294901760
    %v2329 = vsub.f32 %v69, %v2328
    %v2330 = vand.u32 %v2329, 4294901760
    %2331 = vmatpush1.msra.mxu0 %v2330
    %v2332 = vand.u32 %v68, 4294901760
    %v2333 = vsub.f32 %v68, %v2332
    %v2334 = vand.u32 %v2333, 4294901760
    %2335 = vmatprep.subr.mxu0 %v2334
    %v2336 = vand.u32 %v67, 4294901760
    %v2337 = vsub.f32 %v67, %v2336
    %v2338 = vand.u32 %v2337, 4294901760
    %2339 = vmatpush1.msra.mxu0 %v2338
    %v2340 = vand.u32 %v66, 4294901760
    %v2341 = vsub.f32 %v66, %v2340
    %v2342 = vand.u32 %v2341, 4294901760
    %2343 = vmatprep.subr.mxu0 %v2342
    %v2344 = vand.u32 %v65, 4294901760
    %v2345 = vsub.f32 %v65, %v2344
    %v2346 = vand.u32 %v2345, 4294901760
    %2347 = vmatpush1.msra.mxu0 %v2346
    %v2348 = vand.u32 %v64, 4294901760
    %v2349 = vsub.f32 %v64, %v2348
    %v2350 = vand.u32 %v2349, 4294901760
    %2351 = vmatprep.subr.mxu0 %v2350
    %v2352 = vand.u32 %v63, 4294901760
    %v2353 = vsub.f32 %v63, %v2352
    %v2354 = vand.u32 %v2353, 4294901760
    %2355 = vmatpush1.msra.mxu0 %v2354
    %v2356 = vand.u32 %v62, 4294901760
    %v2357 = vsub.f32 %v62, %v2356
    %v2358 = vand.u32 %v2357, 4294901760
    %2359 = vmatprep.subr.mxu0 %v2358
    %v2360 = vand.u32 %v61, 4294901760
    %v2361 = vsub.f32 %v61, %v2360
    %v2362 = vand.u32 %v2361, 4294901760
    %2363 = vmatpush1.msra.mxu0 %v2362
    %v2364 = vand.u32 %v60, 4294901760
    %v2365 = vsub.f32 %v60, %v2364
    %v2366 = vand.u32 %v2365, 4294901760
    %2367 = vmatprep.subr.mxu0 %v2366
    %v2368 = vand.u32 %v59, 4294901760
    %v2369 = vsub.f32 %v59, %v2368
    %v2370 = vand.u32 %v2369, 4294901760
    %2371 = vmatpush1.msra.mxu0 %v2370
    %v2372 = vand.u32 %v58, 4294901760
    %v2373 = vsub.f32 %v58, %v2372
    %v2374 = vand.u32 %v2373, 4294901760
    %2375 = vmatprep.subr.mxu0 %v2374
    %v2376 = vand.u32 %v57, 4294901760
    %v2377 = vsub.f32 %v57, %v2376
    %v2378 = vand.u32 %v2377, 4294901760
    %2379 = vmatpush1.msra.mxu0 %v2378
    %v2380 = vand.u32 %v56, 4294901760
    %v2381 = vsub.f32 %v56, %v2380
    %v2382 = vand.u32 %v2381, 4294901760
    %2383 = vmatprep.subr.mxu0 %v2382
    %v2384 = vand.u32 %v55, 4294901760
    %v2385 = vsub.f32 %v55, %v2384
    %v2386 = vand.u32 %v2385, 4294901760
    %2387 = vmatpush1.msra.mxu0 %v2386
    %v2388 = vand.u32 %v54, 4294901760
    %v2389 = vsub.f32 %v54, %v2388
    %v2390 = vand.u32 %v2389, 4294901760
    %2391 = vmatprep.subr.mxu0 %v2390
    %v2392 = vand.u32 %v53, 4294901760
    %v2393 = vsub.f32 %v53, %v2392
    %v2394 = vand.u32 %v2393, 4294901760
    %2395 = vmatpush1.msra.mxu0 %v2394
    %v2396 = vand.u32 %v52, 4294901760
    %v2397 = vsub.f32 %v52, %v2396
    %v2398 = vand.u32 %v2397, 4294901760
    %2399 = vmatprep.subr.mxu0 %v2398
    %v2400 = vand.u32 %v51, 4294901760
    %v2401 = vsub.f32 %v51, %v2400
    %v2402 = vand.u32 %v2401, 4294901760
    %2403 = vmatpush1.msra.mxu0 %v2402
    %v2404 = vand.u32 %v50, 4294901760
    %v2405 = vsub.f32 %v50, %v2404
    %v2406 = vand.u32 %v2405, 4294901760
    %2407 = vmatprep.subr.mxu0 %v2406
    %v2408 = vand.u32 %v49, 4294901760
    %v2409 = vsub.f32 %v49, %v2408
    %v2410 = vand.u32 %v2409, 4294901760
    %2411 = vmatpush1.msra.mxu0 %v2410
    %v2412 = vand.u32 %v48, 4294901760
    %v2413 = vsub.f32 %v48, %v2412
    %v2414 = vand.u32 %v2413, 4294901760
    %2415 = vmatprep.subr.mxu0 %v2414
    %v2416 = vand.u32 %v47, 4294901760
    %v2417 = vsub.f32 %v47, %v2416
    %v2418 = vand.u32 %v2417, 4294901760
    %2419 = vmatpush1.msra.mxu0 %v2418
    %v2420 = vand.u32 %v46, 4294901760
    %v2421 = vsub.f32 %v46, %v2420
    %v2422 = vand.u32 %v2421, 4294901760
    %2423 = vmatprep.subr.mxu0 %v2422
    %v2424 = vand.u32 %v45, 4294901760
    %v2425 = vsub.f32 %v45, %v2424
    %v2426 = vand.u32 %v2425, 4294901760
    %2427 = vmatpush1.msra.mxu0 %v2426
    %v2428 = vand.u32 %v108, 4294901760
    %v2429 = vsub.f32 %v108, %v2428
    %v2430 = vand.u32 %v2429, 4294901760
    %2431 = vmatprep.subr.mxu0 %v2430
    %v2432 = vand.u32 %v107, 4294901760
    %v2433 = vsub.f32 %v107, %v2432
    %v2434 = vand.u32 %v2433, 4294901760
    %2435 = vmatpush2.msra.mxu0 %v2434
    %v2436 = vand.u32 %v106, 4294901760
    %v2437 = vsub.f32 %v106, %v2436
    %v2438 = vand.u32 %v2437, 4294901760
    %2439 = vmatprep.subr.mxu0 %v2438
    %v2440 = vand.u32 %v105, 4294901760
    %v2441 = vsub.f32 %v105, %v2440
    %v2442 = vand.u32 %v2441, 4294901760
    %2443 = vmatpush2.msra.mxu0 %v2442
    %v2444 = vand.u32 %v104, 4294901760
    %v2445 = vsub.f32 %v104, %v2444
    %v2446 = vand.u32 %v2445, 4294901760
    %2447 = vmatprep.subr.mxu0 %v2446
    %v2448 = vand.u32 %v103, 4294901760
    %v2449 = vsub.f32 %v103, %v2448
    %v2450 = vand.u32 %v2449, 4294901760
    %2451 = vmatpush2.msra.mxu0 %v2450
    %v2452 = vand.u32 %v102, 4294901760
    %v2453 = vsub.f32 %v102, %v2452
    %v2454 = vand.u32 %v2453, 4294901760
    %2455 = vmatprep.subr.mxu0 %v2454
    %v2456 = vand.u32 %v101, 4294901760
    %v2457 = vsub.f32 %v101, %v2456
    %v2458 = vand.u32 %v2457, 4294901760
    %2459 = vmatpush2.msra.mxu0 %v2458
    %v2460 = vand.u32 %v100, 4294901760
    %v2461 = vsub.f32 %v100, %v2460
    %v2462 = vand.u32 %v2461, 4294901760
    %2463 = vmatprep.subr.mxu0 %v2462
    %v2464 = vand.u32 %v99, 4294901760
    %v2465 = vsub.f32 %v99, %v2464
    %v2466 = vand.u32 %v2465, 4294901760
    %2467 = vmatpush2.msra.mxu0 %v2466
    %v2468 = vand.u32 %v98, 4294901760
    %v2469 = vsub.f32 %v98, %v2468
    %v2470 = vand.u32 %v2469, 4294901760
    %2471 = vmatprep.subr.mxu0 %v2470
    %v2472 = vand.u32 %v97, 4294901760
    %v2473 = vsub.f32 %v97, %v2472
    %v2474 = vand.u32 %v2473, 4294901760
    %2475 = vmatpush2.msra.mxu0 %v2474
    %v2476 = vand.u32 %v96, 4294901760
    %v2477 = vsub.f32 %v96, %v2476
    %v2478 = vand.u32 %v2477, 4294901760
    %2479 = vmatprep.subr.mxu0 %v2478
    %v2480 = vand.u32 %v95, 4294901760
    %v2481 = vsub.f32 %v95, %v2480
    %v2482 = vand.u32 %v2481, 4294901760
    %2483 = vmatpush2.msra.mxu0 %v2482
    %v2484 = vand.u32 %v94, 4294901760
    %v2485 = vsub.f32 %v94, %v2484
    %v2486 = vand.u32 %v2485, 4294901760
    %2487 = vmatprep.subr.mxu0 %v2486
    %v2488 = vand.u32 %v93, 4294901760
    %v2489 = vsub.f32 %v93, %v2488
    %v2490 = vand.u32 %v2489, 4294901760
    %2491 = vmatpush2.msra.mxu0 %v2490
    %v2492 = vand.u32 %v92, 4294901760
    %v2493 = vsub.f32 %v92, %v2492
    %v2494 = vand.u32 %v2493, 4294901760
    %2495 = vmatprep.subr.mxu0 %v2494
    %v2496 = vand.u32 %v91, 4294901760
    %v2497 = vsub.f32 %v91, %v2496
    %v2498 = vand.u32 %v2497, 4294901760
    %2499 = vmatpush2.msra.mxu0 %v2498
    %v2500 = vand.u32 %v90, 4294901760
    %v2501 = vsub.f32 %v90, %v2500
    %v2502 = vand.u32 %v2501, 4294901760
    %2503 = vmatprep.subr.mxu0 %v2502
    %v2504 = vand.u32 %v89, 4294901760
    %v2505 = vsub.f32 %v89, %v2504
    %v2506 = vand.u32 %v2505, 4294901760
    %2507 = vmatpush2.msra.mxu0 %v2506
    %v2508 = vand.u32 %v88, 4294901760
    %v2509 = vsub.f32 %v88, %v2508
    %v2510 = vand.u32 %v2509, 4294901760
    %2511 = vmatprep.subr.mxu0 %v2510
    %v2512 = vand.u32 %v87, 4294901760
    %v2513 = vsub.f32 %v87, %v2512
    %v2514 = vand.u32 %v2513, 4294901760
    %2515 = vmatpush2.msra.mxu0 %v2514
    %v2516 = vand.u32 %v86, 4294901760
    %v2517 = vsub.f32 %v86, %v2516
    %v2518 = vand.u32 %v2517, 4294901760
    %2519 = vmatprep.subr.mxu0 %v2518
    %v2520 = vand.u32 %v85, 4294901760
    %v2521 = vsub.f32 %v85, %v2520
    %v2522 = vand.u32 %v2521, 4294901760
    %2523 = vmatpush2.msra.mxu0 %v2522
    %v2524 = vand.u32 %v84, 4294901760
    %v2525 = vsub.f32 %v84, %v2524
    %v2526 = vand.u32 %v2525, 4294901760
    %2527 = vmatprep.subr.mxu0 %v2526
    %v2528 = vand.u32 %v83, 4294901760
    %v2529 = vsub.f32 %v83, %v2528
    %v2530 = vand.u32 %v2529, 4294901760
    %2531 = vmatpush2.msra.mxu0 %v2530
    %v2532 = vand.u32 %v82, 4294901760
    %v2533 = vsub.f32 %v82, %v2532
    %v2534 = vand.u32 %v2533, 4294901760
    %2535 = vmatprep.subr.mxu0 %v2534
    %v2536 = vand.u32 %v81, 4294901760
    %v2537 = vsub.f32 %v81, %v2536
    %v2538 = vand.u32 %v2537, 4294901760
    %2539 = vmatpush2.msra.mxu0 %v2538
    %v2540 = vand.u32 %v80, 4294901760
    %v2541 = vsub.f32 %v80, %v2540
    %v2542 = vand.u32 %v2541, 4294901760
    %2543 = vmatprep.subr.mxu0 %v2542
    %v2544 = vand.u32 %v79, 4294901760
    %v2545 = vsub.f32 %v79, %v2544
    %v2546 = vand.u32 %v2545, 4294901760
    %2547 = vmatpush2.msra.mxu0 %v2546
    %v2548 = vand.u32 %v78, 4294901760
    %v2549 = vsub.f32 %v78, %v2548
    %v2550 = vand.u32 %v2549, 4294901760
    %2551 = vmatprep.subr.mxu0 %v2550
    %v2552 = vand.u32 %v77, 4294901760
    %v2553 = vsub.f32 %v77, %v2552
    %v2554 = vand.u32 %v2553, 4294901760
    %2555 = vmatpush2.msra.mxu0 %v2554
    %v2556 = vand.u32 %v1415, 4294901760
    %2557 = vmatprep.mubr.f32.mxu0 %v2556
    %v2558 = vand.u32 %v1414, 4294901760
    %2559 = vmatmul.mubr.f32.gmra.mxu0 %v2558
    %v2560 = vpop.f32.mrf.mxu0
    %v2561 = vadd.f32 %v2296, %v2560
    %v2562 = vpop.f32.mrf.mxu0
    %v2563 = vadd.f32 %v2298, %v2562
    %2564 = vdwg.mxu0
    %v2565 = vand.u32 %v76, 4294901760
    %2566 = vmatprep.subr.mxu0 %v2565
    %v2567 = vand.u32 %v75, 4294901760
    %2568 = vmatpush1.msra.mxu0 %v2567
    %v2569 = vand.u32 %v74, 4294901760
    %2570 = vmatprep.subr.mxu0 %v2569
    %v2571 = vand.u32 %v73, 4294901760
    %2572 = vmatpush1.msra.mxu0 %v2571
    %v2573 = vand.u32 %v72, 4294901760
    %2574 = vmatprep.subr.mxu0 %v2573
    %v2575 = vand.u32 %v71, 4294901760
    %2576 = vmatpush1.msra.mxu0 %v2575
    %v2577 = vand.u32 %v70, 4294901760
    %2578 = vmatprep.subr.mxu0 %v2577
    %v2579 = vand.u32 %v69, 4294901760
    %2580 = vmatpush1.msra.mxu0 %v2579
    %v2581 = vand.u32 %v68, 4294901760
    %2582 = vmatprep.subr.mxu0 %v2581
    %v2583 = vand.u32 %v67, 4294901760
    %2584 = vmatpush1.msra.mxu0 %v2583
    %v2585 = vand.u32 %v66, 4294901760
    %2586 = vmatprep.subr.mxu0 %v2585
    %v2587 = vand.u32 %v65, 4294901760
    %2588 = vmatpush1.msra.mxu0 %v2587
    %v2589 = vand.u32 %v64, 4294901760
    %2590 = vmatprep.subr.mxu0 %v2589
    %v2591 = vand.u32 %v63, 4294901760
    %2592 = vmatpush1.msra.mxu0 %v2591
    %v2593 = vand.u32 %v62, 4294901760
    %2594 = vmatprep.subr.mxu0 %v2593
    %v2595 = vand.u32 %v61, 4294901760
    %2596 = vmatpush1.msra.mxu0 %v2595
    %v2597 = vand.u32 %v60, 4294901760
    %2598 = vmatprep.subr.mxu0 %v2597
    %v2599 = vand.u32 %v59, 4294901760
    %2600 = vmatpush1.msra.mxu0 %v2599
    %v2601 = vand.u32 %v58, 4294901760
    %2602 = vmatprep.subr.mxu0 %v2601
    %v2603 = vand.u32 %v57, 4294901760
    %2604 = vmatpush1.msra.mxu0 %v2603
    %v2605 = vand.u32 %v56, 4294901760
    %2606 = vmatprep.subr.mxu0 %v2605
    %v2607 = vand.u32 %v55, 4294901760
    %2608 = vmatpush1.msra.mxu0 %v2607
    %v2609 = vand.u32 %v54, 4294901760
    %2610 = vmatprep.subr.mxu0 %v2609
    %v2611 = vand.u32 %v53, 4294901760
    %2612 = vmatpush1.msra.mxu0 %v2611
    %v2613 = vand.u32 %v52, 4294901760
    %2614 = vmatprep.subr.mxu0 %v2613
    %v2615 = vand.u32 %v51, 4294901760
    %2616 = vmatpush1.msra.mxu0 %v2615
    %v2617 = vand.u32 %v50, 4294901760
    %2618 = vmatprep.subr.mxu0 %v2617
    %v2619 = vand.u32 %v49, 4294901760
    %2620 = vmatpush1.msra.mxu0 %v2619
    %v2621 = vand.u32 %v48, 4294901760
    %2622 = vmatprep.subr.mxu0 %v2621
    %v2623 = vand.u32 %v47, 4294901760
    %2624 = vmatpush1.msra.mxu0 %v2623
    %v2625 = vand.u32 %v46, 4294901760
    %2626 = vmatprep.subr.mxu0 %v2625
    %v2627 = vand.u32 %v45, 4294901760
    %2628 = vmatpush1.msra.mxu0 %v2627
    %v2629 = vand.u32 %v108, 4294901760
    %2630 = vmatprep.subr.mxu0 %v2629
    %v2631 = vand.u32 %v107, 4294901760
    %2632 = vmatpush2.msra.mxu0 %v2631
    %v2633 = vand.u32 %v106, 4294901760
    %2634 = vmatprep.subr.mxu0 %v2633
    %v2635 = vand.u32 %v105, 4294901760
    %2636 = vmatpush2.msra.mxu0 %v2635
    %v2637 = vand.u32 %v104, 4294901760
    %2638 = vmatprep.subr.mxu0 %v2637
    %v2639 = vand.u32 %v103, 4294901760
    %2640 = vmatpush2.msra.mxu0 %v2639
    %v2641 = vand.u32 %v102, 4294901760
    %2642 = vmatprep.subr.mxu0 %v2641
    %v2643 = vand.u32 %v101, 4294901760
    %2644 = vmatpush2.msra.mxu0 %v2643
    %v2645 = vand.u32 %v100, 4294901760
    %2646 = vmatprep.subr.mxu0 %v2645
    %v2647 = vand.u32 %v99, 4294901760
    %2648 = vmatpush2.msra.mxu0 %v2647
    %v2649 = vand.u32 %v98, 4294901760
    %2650 = vmatprep.subr.mxu0 %v2649
    %v2651 = vand.u32 %v97, 4294901760
    %2652 = vmatpush2.msra.mxu0 %v2651
    %v2653 = vand.u32 %v96, 4294901760
    %2654 = vmatprep.subr.mxu0 %v2653
    %v2655 = vand.u32 %v95, 4294901760
    %2656 = vmatpush2.msra.mxu0 %v2655
    %v2657 = vand.u32 %v94, 4294901760
    %2658 = vmatprep.subr.mxu0 %v2657
    %v2659 = vand.u32 %v93, 4294901760
    %2660 = vmatpush2.msra.mxu0 %v2659
    %v2661 = vand.u32 %v92, 4294901760
    %2662 = vmatprep.subr.mxu0 %v2661
    %v2663 = vand.u32 %v91, 4294901760
    %2664 = vmatpush2.msra.mxu0 %v2663
    %v2665 = vand.u32 %v90, 4294901760
    %2666 = vmatprep.subr.mxu0 %v2665
    %v2667 = vand.u32 %v89, 4294901760
    %2668 = vmatpush2.msra.mxu0 %v2667
    %v2669 = vand.u32 %v88, 4294901760
    %2670 = vmatprep.subr.mxu0 %v2669
    %v2671 = vand.u32 %v87, 4294901760
    %2672 = vmatpush2.msra.mxu0 %v2671
    %v2673 = vand.u32 %v86, 4294901760
    %2674 = vmatprep.subr.mxu0 %v2673
    %v2675 = vand.u32 %v85, 4294901760
    %2676 = vmatpush2.msra.mxu0 %v2675
    %v2677 = vand.u32 %v84, 4294901760
    %2678 = vmatprep.subr.mxu0 %v2677
    %v2679 = vand.u32 %v83, 4294901760
    %2680 = vmatpush2.msra.mxu0 %v2679
    %v2681 = vand.u32 %v82, 4294901760
    %2682 = vmatprep.subr.mxu0 %v2681
    %v2683 = vand.u32 %v81, 4294901760
    %2684 = vmatpush2.msra.mxu0 %v2683
    %v2685 = vand.u32 %v80, 4294901760
    %2686 = vmatprep.subr.mxu0 %v2685
    %v2687 = vand.u32 %v79, 4294901760
    %2688 = vmatpush2.msra.mxu0 %v2687
    %v2689 = vand.u32 %v78, 4294901760
    %2690 = vmatprep.subr.mxu0 %v2689
    %v2691 = vand.u32 %v77, 4294901760
    %2692 = vmatpush2.msra.mxu0 %v2691
    %v2693 = vand.u32 %v1415, 4294901760
    %2694 = vmatprep.mubr.f32.mxu0 %v2693
    %v2695 = vand.u32 %v1414, 4294901760
    %2696 = vmatmul.mubr.f32.gmra.mxu0 %v2695
    %v2697 = vpop.f32.mrf.mxu0
    %v2698 = vadd.f32 %v2561, %v2697
    %v2699 = vpop.f32.mrf.mxu0
    %v2700 = vadd.f32 %v2563, %v2699
    %2701 = vdwg.mxu0
    %v2702 = vrcp.pop 32.0
    %v2703 = vmul.f32 %v1402, %v2702
    %v2704 = vmul.f32 %v1404, %v2702
    %v2705 = vmul.f32 %v1402, %v2703
    %v2706 = vmul.f32 %v1404, %v2704
    %v2707 = vsub.f32 %v2698, %v2705
    %v2708 = vsub.f32 %v2700, %v2706
    %v2709 = vrcp.pop 31.0
    %v2710 = vmul.f32 %v2707, %v2709
    %v2711 = vmul.f32 %v2708, %v2709
    %v2712 = vmax.f32 %v2710, 0.0
    %v2713 = vmax.f32 %v2711, 0.0
    %v2714 = vrsqrt.pop %v2712
    %v2715 = vmul.f32 %v2712, %v2714
    %vm2716 = vcmp.eq.f32.partialorder %v2712, inf
    %v2717 = vsel %vm2716, %v2712, %v2715
    %vm2718 = vcmp.eq.f32.partialorder %v2712, 0.0
    %v2719 = vand.u32 %v2712, 2147483648
    %v2720 = vsel %vm2718, %v2719, %v2717
    %v2721 = vrsqrt.pop %v2713
    %v2722 = vmul.f32 %v2713, %v2721
    %vm2723 = vcmp.eq.f32.partialorder %v2713, inf
    %v2724 = vsel %vm2723, %v2713, %v2722
    %vm2725 = vcmp.eq.f32.partialorder %v2713, 0.0
    %v2726 = vand.u32 %v2713, 2147483648
    %v2727 = vsel %vm2725, %v2726, %v2724
    %v2728 = vadd.f32 %v2720, 1e-06
    %v2729 = vadd.f32 %v2727, 1e-06
    %v2730 = vrcp.pop %v2728
    %v2731 = vrcp.pop %v2729
    %v2734 = vcombine.low %v2703, %v2704
    %v2736 = vunpack.c.l.s4 1983009808
    %v2737 = vunpack.c.0.s8 %v2736
    %v2738 = vlaneseq
    %v2739 = vshrl.u32 %v2738, 7
    %v2740 = vsub.s32 %v2737, %v2739
    %v2741 = vrot.slane %v2734, %v2740
    %v2743 = vsub.f32 %v44, %v2741
    %v2746 = vcombine.low %v2730, %v2731
    %v2748 = vunpack.c.l.s4 1983009808
    %v2749 = vunpack.c.0.s8 %v2748
    %v2750 = vlaneseq
    %v2751 = vshrl.u32 %v2750, 7
    %v2752 = vsub.s32 %v2749, %v2751
    %v2753 = vrot.slane %v2746, %v2752
    %v2755 = vmul.f32 %v2743, %v2753
    %v2757 = vlaneseq
    %v2758 = vshrl.u32 %v2757, 7
    %v2759 = vsub.s32 0, %v2758
    %v2760 = vrot.slane %v109, %v2759
    %v2761 = vlaneseq
    %v2762 = vshrl.u32 %v2761, 7
    %v2763 = vsub.s32 1, %v2762
    %v2764 = vrot.slane %v109, %v2763
    %v2765 = vcombine.low %v2760, %v2764
    %v2767 = vunpack.c.l.s4 1983009808
    %v2768 = vunpack.c.0.s8 %v2767
    %v2769 = vlaneseq
    %v2770 = vshrl.u32 %v2769, 7
    %v2771 = vsub.s32 %v2768, %v2770
    %v2772 = vrot.slane %v2765, %v2771
    %v2774 = vmul.f32 %v2755, %v2772
    %v2776 = vlaneseq
    %v2777 = vshrl.u32 %v2776, 7
    %v2778 = vsub.s32 0, %v2777
    %v2779 = vrot.slane %v110, %v2778
    %v2780 = vlaneseq
    %v2781 = vshrl.u32 %v2780, 7
    %v2782 = vsub.s32 1, %v2781
    %v2783 = vrot.slane %v110, %v2782
    %v2784 = vcombine.low %v2779, %v2783
    %v2786 = vunpack.c.l.s4 1983009808
    %v2787 = vunpack.c.0.s8 %v2786
    %v2788 = vlaneseq
    %v2789 = vshrl.u32 %v2788, 7
    %v2790 = vsub.s32 %v2787, %v2789
    %v2791 = vrot.slane %v2784, %v2790
    %v2793 = vadd.f32 %v2774, %v2791
    %2794 = vst [vmem:[#allocation7] sm:$0xf] %v2793
    // Predicated region
    $region26: #{tpu_custom_call.1} parent=1 // pred_check
      _
    $region27: #{tpu_custom_call.1} parent=1 // pred_check_branch
      %2796 = sbr.rel (0) target = $region29
    $region28: #{tpu_custom_call.1} parent=1 // pred_region
      %s2798 = ssub.s32 64, 64
      %2799 = vsyncadd [#allocation4], %s2798
      %s2801 = sshll.u32 [#allocation7], 4
      %s2802 = int_to_ptr.vmem [resolvable:$true] %s2801
      %2804 = dma.vmem_to_hbm [thread:$0]  %s2802, 64, %s4, [#allocation4]
    $region29: #{tpu_custom_call.1} parent=1 // pred_fallthru
      _
    // Predicated region
    $region30: #{tpu_custom_call.1} parent=1 // pred_check
      _
    $region31: #{tpu_custom_call.1} parent=1 // pred_check_branch
      %2806 = sbr.rel (0) target = $region33
    $region32: #{tpu_custom_call.1} parent=1 // pred_region
      %2807 = dma.done [#allocation4], 64
    $region33: #{tpu_custom_call.1} parent=1 // pred_fallthru
      _
    %2808 = vsyncpa [#allocation3], 1
    %2809 = vsyncpa [#allocation6], 1
    %2810 = vsyncpa [#allocation4], 1

// kernel: tpu_custom_call.1
$region0: #{tpu_custom_call.1}
  #allocation0 [shape = 'u32[]', space=smem, size = 0x4, offset = 0x4, fixed_abs, tag = 'smem constant byte address 0x4 - core index']
  #allocation1 [shape = 'u32[144,128]{1,0:T(1,128)}', space=vmem, size = 0x12000, scoped, tag = 'internal scratch']
  %s0 = inlined_call_operand.hbm [shape: f32[16,32], index: 0, kind: input, shape index: {}]
  %s1 = inlined_call_operand.vmem [shape: f32[1,32], index: 1, kind: input, shape index: {}]
  %s2 = inlined_call_operand.vmem [shape: f32[1,32], index: 2, kind: input, shape index: {}]
  %s3 = inlined_call_operand.hbm [shape: f32[16,32], index: 3, kind: output, shape index: {}]
  %s4 = sld [smem:[#allocation0]]
  $region26: #{tpu_custom_call.1} parent=0
    _
  %s6 = ssub.s32 1, %s4
  %s7 = scalar_select 0, %s6, %s4
  $region1: #{tpu_custom_call.1} parent=0
    #allocation2 [shape = 'u8[8192]{0}', space=vmem, size = 0x2000, scoped, tag = 'input window, operand 0, single buffered']
    #allocation3 [shape = 's32[1]{0}', space=sflag, size = 0x4, scoped, tag = 'scoped memory for tpu_custom_call.1']
    #allocation4 [shape = 's32[1]{0}', space=sflag, size = 0x4, scoped, tag = 'scoped memory for tpu_custom_call.1']
    #allocation5 [shape = 'u8[8192]{0}', space=vmem, size = 0x2000, scoped, tag = 'output window, operand 0, single buffered']
    %8 = vsyncpa [#allocation3], 0
    %9 = vsyncpa [#allocation4], 0
    // Predicated region
    $region2: #{tpu_custom_call.1} parent=1 // pred_check
      _
    $region3: #{tpu_custom_call.1} parent=1 // pred_check_branch
      %11 = sbr.rel (0) target = $region5
    $region4: #{tpu_custom_call.1} parent=1 // pred_region
      %s13 = ssub.s32 256, 256
      %14 = vsyncadd [#allocation3], %s13
      %s15 = sshll.u32 [#allocation2], 4
      %s16 = int_to_ptr.vmem [resolvable:$true] %s15
      %21 = dma.hbm_to_vmem [thread:$0]  %s0, 256, %s16, [#allocation3], 128, 128, 8
    $region5: #{tpu_custom_call.1} parent=1 // pred_fallthru
      _
    // Predicated region
    $region6: #{tpu_custom_call.1} parent=1 // pred_check
      _
    $region7: #{tpu_custom_call.1} parent=1 // pred_check_branch
      %23 = sbr.rel (0) target = $region9
    $region8: #{tpu_custom_call.1} parent=1 // pred_region
      _
    $region9: #{tpu_custom_call.1} parent=1 // pred_fallthru
      _
    // Predicated region
    $region10: #{tpu_custom_call.1} parent=1 // pred_check
      _
    $region11: #{tpu_custom_call.1} parent=1 // pred_check_branch
      %25 = sbr.rel (0) target = $region13
    $region12: #{tpu_custom_call.1} parent=1 // pred_region
      _
    $region13: #{tpu_custom_call.1} parent=1 // pred_fallthru
      _
    // Predicated region
    $region14: #{tpu_custom_call.1} parent=1 // pred_check
      _
    $region15: #{tpu_custom_call.1} parent=1 // pred_check_branch
      %27 = sbr.rel (0) target = $region17
    $region16: #{tpu_custom_call.1} parent=1 // pred_region
      %28 = dma.done [#allocation3], 256
    $region17: #{tpu_custom_call.1} parent=1 // pred_fallthru
      _
    %v29 = vld [vmem:[#allocation2] sm:$0xff]
    %v30 = vld [vmem:[#allocation2 + $0x8] sm:$0xff]
    %v31 = vld [vmem:[%s1] sm:$0x1]
    %v32 = vld [vmem:[%s2] sm:$0x1]
    %vm33 = vcmask 261120
    %v34 = vsel %vm33, %v29, 0.0
    %35 = vadd.xlane.f32.xlu0 %v34
    %v36 = vpop.xlane.xlu0 %35
    %v37 = vsel %vm33, %v30, 0.0
    %38 = vadd.xlane.f32.xlu0 %v37
    %v39 = vpop.xlane.xlu0 %38
    %v40 = vmul.f32 %v29, %v29
    %v41 = vmul.f32 %v30, %v30
    %v42 = vsel %vm33, %v40, 0.0
    %43 = vadd.xlane.f32.xlu0 %v42
    %v44 = vpop.xlane.xlu0 %43
    %v45 = vsel %vm33, %v41, 0.0
    %46 = vadd.xlane.f32.xlu0 %v45
    %v47 = vpop.xlane.xlu0 %46
    %v48 = vrcp.pop 32.0
    %v49 = vmul.f32 %v36, %v48
    %v50 = vmul.f32 %v39, %v48
    %v51 = vmul.f32 %v36, %v49
    %v52 = vmul.f32 %v39, %v50
    %v53 = vsub.f32 %v44, %v51
    %v54 = vsub.f32 %v47, %v52
    %v55 = vrcp.pop 31.0
    %v56 = vmul.f32 %v53, %v55
    %v57 = vmul.f32 %v54, %v55
    %v58 = vmax.f32 %v56, 0.0
    %v59 = vmax.f32 %v57, 0.0
    %v60 = vrsqrt.pop %v58
    %v61 = vmul.f32 %v58, %v60
    %vm62 = vcmp.eq.f32.partialorder %v58, inf
    %v63 = vsel %vm62, %v58, %v61
    %vm64 = vcmp.eq.f32.partialorder %v58, 0.0
    %v65 = vand.u32 %v58, 2147483648
    %v66 = vsel %vm64, %v65, %v63
    %v67 = vrsqrt.pop %v59
    %v68 = vmul.f32 %v59, %v67
    %vm69 = vcmp.eq.f32.partialorder %v59, inf
    %v70 = vsel %vm69, %v59, %v68
    %vm71 = vcmp.eq.f32.partialorder %v59, 0.0
    %v72 = vand.u32 %v59, 2147483648
    %v73 = vsel %vm71, %v72, %v70
    %v74 = vadd.f32 %v66, 1e-06
    %v75 = vadd.f32 %v73, 1e-06
    %v76 = vrcp.pop %v74
    %v77 = vrcp.pop %v75
    %v78 = vsub.f32 %v29, %v49
    %v79 = vsub.f32 %v30, %v50
    %v80 = vmul.f32 %v78, %v76
    %v81 = vmul.f32 %v79, %v77
    %v83 = vlaneseq
    %v84 = vshrl.u32 %v83, 7
    %v85 = vsub.s32 0, %v84
    %v86 = vrot.slane %v31, %v85
    %v88 = vmul.f32 %v80, %v86
    %v89 = vmul.f32 %v81, %v86
    %v91 = vlaneseq
    %v92 = vshrl.u32 %v91, 7
    %v93 = vsub.s32 0, %v92
    %v94 = vrot.slane %v32, %v93
    %v96 = vadd.f32 %v88, %v94
    %v97 = vadd.f32 %v89, %v94
    %98 = vst.msk [vmem:[#allocation5] sm:$0xff] %vm33, %v96
    %99 = vst.msk [vmem:[#allocation5 + $0x8] sm:$0xff] %vm33, %v97
    // Predicated region
    $region18: #{tpu_custom_call.1} parent=1 // pred_check
      _
    $region19: #{tpu_custom_call.1} parent=1 // pred_check_branch
      %101 = sbr.rel (0) target = $region21
    $region20: #{tpu_custom_call.1} parent=1 // pred_region
      %s103 = ssub.s32 256, 256
      %104 = vsyncadd [#allocation4], %s103
      %s105 = sshll.u32 [#allocation5], 4
      %s106 = int_to_ptr.vmem [resolvable:$true] %s105
      %111 = dma.vmem_to_hbm [thread:$0]  %s106, 256, %s3, [#allocation4], 128, 128, 8
    $region21: #{tpu_custom_call.1} parent=1 // pred_fallthru
      _
    // Predicated region
    $region22: #{tpu_custom_call.1} parent=1 // pred_check
      _
    $region23: #{tpu_custom_call.1} parent=1 // pred_check_branch
      %113 = sbr.rel (0) target = $region25
    $region24: #{tpu_custom_call.1} parent=1 // pred_region
      %114 = dma.done [#allocation4], 256
    $region25: #{tpu_custom_call.1} parent=1 // pred_fallthru
      _
    %115 = vsyncpa [#allocation3], 1
    %116 = vsyncpa [#allocation4], 1

</llo_original>
